<compile_context>
chip_gen: v7x
topology: tpu7x:2x2x1
jax: 0.10.0
libtpu: 0.0.40
codegen_flags: <defaults>
</compile_context>

<pallas_src>
import math
from functools import partial

import jax
import jax.numpy as jnp
from jax.experimental import pallas as pl
from jax.experimental.pallas import tpu as pltpu


def _make_divisible(v, divisor, min_value=None):
    if min_value is None:
        min_value = divisor
    new_v = max(min_value, int(v + divisor / 2) // divisor * divisor)
    if new_v < 0.9 * v:
        new_v += divisor
    return new_v


# ----------------------------- Pallas kernel ------------------------------- #
def sandglass_kernel(x_ref, w1_ref, b1_ref, wf_ref, bf_ref, w2_ref, b4_ref,
                     out_ref, *, H, W, Cin, Cout, stride, use_res, n_img, pg):
    BH = n_img * H
    WCi = W * Cin
    WCo = W * Cout
    GCi = pg * Cin
    GCo = pg * Cout
    n_grp = W // pg

    # Vertical (sublane) boundary masks, hoisted once and shared by both
    # depthwise stages.  (BH, 1) iota broadcasts across lanes; rows % H keeps
    # taps from leaking across batch-stacked images (H is typically a power of
    # two, so this is a cheap AND).
    rows = jax.lax.broadcasted_iota(jnp.int32, (BH, 1), 0)
    rmod = rows % H
    m_up = rmod >= 1
    m_dn = rmod <= H - 2

    def dw3x3(v, w_ref, C, WC):
        # 3x3 depthwise conv on a packed-lane (BH, W*C) slab.  The horizontal
        # zero-pad is folded into the wrapper-tiled weights, so only the two
        # vertical edge selects remain; the lane/sublane rolls hit the XLU.
        up = jnp.where(m_up, pltpu.roll(v, 1, axis=0), 0.0)        # x[h-1]
        dn = jnp.where(m_dn, pltpu.roll(v, BH - 1, axis=0), 0.0)   # x[h+1]
        acc = None
        for ky, r in enumerate((up, v, dn)):
            term = (pltpu.roll(r, C, axis=1) * w_ref[3 * ky + 0]       # x[., w-1]
                    + r * w_ref[3 * ky + 1]
                    + pltpu.roll(r, WC - C, axis=1) * w_ref[3 * ky + 2])  # x[., w+1]
            acc = term if acc is None else acc + term
        return acc

    x = x_ref[0]                                                   # (BH, W*Cin)

    # ---- stage 1: depthwise 3x3 (BN scale folded) + bias + ReLU6 ----
    y = jnp.clip(dw3x3(x, w1_ref, Cin, WCi) + b1_ref[0], 0.0, 6.0)

    # ---- stages 2+3 fused: per-pixel 1x1 convs as lane-group MXU matmuls ----
    # wf is kron(eye(pg), w_fused): one small block-diagonal weight reused for
    # every 128-lane-aligned group of pg pixels (no relayout on the slices).
    wf = wf_ref[...]
    parts = [jnp.dot(y[:, g * GCi:(g + 1) * GCi], wf,
                     preferred_element_type=jnp.float32)
             for g in range(n_grp)]
    p = parts[0] if n_grp == 1 else jnp.concatenate(parts, axis=1)  # (BH, W*Cout)
    p = jnp.clip(p + bf_ref[0], 0.0, 6.0)

    # ---- stage 4: depthwise 3x3 (BN scale folded) + bias ----
    out = dw3x3(p, w2_ref, Cout, WCo) + b4_ref[0]

    if stride == 2:
        # TODO(synk): compute only the strided rows/cols (and do the lane
        # compaction with an MXU selection matmul) instead of dense+slice.
        Ho = (H - 1) // 2 + 1
        Wo = (W - 1) // 2 + 1
        out = out.reshape(n_img, H, W, Cout)[:, ::2, ::2, :]
        out = out.reshape(n_img * Ho, Wo * Cout)

    if use_res:
        # TODO(synk): identity_tensor_multiplier != 1.0 (partial-channel
        # residual) not exercised; default multiplier=1.0 -> full residual add.
        out = out + x

    out_ref[0] = out.astype(out_ref.dtype)


# ----------------------- one-time parameter folding ------------------------ #
def _pick_group_pixels(W, Cin, Cout):
    """Smallest pixels-per-group so both the input and output lane groups are
    multiples of 128 lanes (128-aligned slices need no relayout)."""
    for pg in range(1, W + 1):
        if W % pg == 0 and (pg * Cin) % 128 == 0 and (pg * Cout) % 128 == 0:
            return pg
    return W     # fallback: full-width block-diagonal (still correct)


def fold_sandglass_params(params, *, W):
    """Eval-mode BN folding + packed-lane weight layout.  Call ONCE and reuse
    the result for every forward call (avoids per-call folding overhead)."""
    Cin = params['w_dw1'].shape[1]
    Cout = params['w_dw2'].shape[1]
    pg = _pick_group_pixels(W, Cin, Cout)

    def tile_dw(w9c, bn_s, C):
        w = w9c * bn_s[0][None, :]                        # fold BN scale (9, C)
        wt = jnp.tile(w, (1, W))                          # (9, W*C)
        # Fold the horizontal zero-pad into the weights: left tap (kx==0) is
        # invalid for pixel 0, right tap (kx==2) for pixel W-1 -> zero those
        # lanes so the kernel needs no per-lane wrap masks.
        for r in (0, 3, 6):
            wt = wt.at[r, :C].set(0.0)
        for r in (2, 5, 8):
            wt = wt.at[r, W * C - C:].set(0.0)
        return wt

    folded = {}
    folded['w1t'] = tile_dw(params['w_dw1'], params['bn1_s'], Cin)       # (9, W*Cin)
    folded['b1t'] = jnp.tile(params['bn1_b'], (1, W))                    # (1, W*Cin)

    # Fuse 1x1 expand(+BN, no act) with 1x1 reduce(+BN): exact (no nonlinearity
    # in between).  BN2/BN3 scales folded into the fused matrix and bias.
    w_e = params['w_e'] * params['bn2_s'][0][None, :]                    # (Cin, hid)
    w_fused = (w_e @ params['w_p']) * params['bn3_s'][0][None, :]        # (Cin, Cout)
    b_fused = ((params['bn2_b'][0] @ params['w_p']) * params['bn3_s'][0]
               + params['bn3_b'][0])                                     # (Cout,)
    folded['wf'] = jnp.kron(jnp.eye(pg, dtype=w_fused.dtype), w_fused)   # (pg*Cin, pg*Cout)
    folded['bf'] = jnp.tile(b_fused[None, :], (1, W))                    # (1, W*Cout)

    folded['w2t'] = tile_dw(params['w_dw2'], params['bn4_s'], Cout)      # (9, W*Cout)
    folded['b4t'] = jnp.tile(params['bn4_b'], (1, W))                    # (1, W*Cout)
    return folded


def _images_per_step(batch):
    """Images stacked per grid step: collapse the batch into sublanes on
    single-TensorCore chips (v5e/v6e) to cut per-grid-step overhead; keep one
    image per step on multi-TC chips (v7x) so the 'parallel' grid shards."""
    cores = 1
    try:
        dev = jax.devices()[0]
        n = getattr(dev, "num_cores", None)
        if n:
            cores = int(n)
        elif "v7" in str(getattr(dev, "device_kind", "")).lower():
            cores = 2
    except Exception:
        cores = 1
    steps = max(1, min(batch, cores))
    while batch % steps:
        steps -= 1
    return batch // steps


# ------------------------------ JAX wrapper -------------------------------- #
@partial(jax.jit, static_argnames=("stride", "use_res", "images_per_step"))
def sandglass_forward(x_nchw, folded, *, stride, use_res, images_per_step=1):
    x = jnp.transpose(x_nchw, (0, 2, 3, 1))                  # NCHW -> NHWC
    B, H, W, Cin = x.shape
    Cout = folded['w2t'].shape[1] // W
    pg = folded['wf'].shape[0] // Cin
    assert folded['w1t'].shape[1] == W * Cin, "folded params built for another W"
    assert not (use_res and stride != 1), "residual requires stride == 1"
    assert B % images_per_step == 0
    n_img = images_per_step
    G = B // n_img
    Ho = (H - 1) // stride + 1
    Wo = (W - 1) // stride + 1

    x2d = x.reshape(G, n_img * H, W * Cin)                   # lane-dense slabs

    kern = partial(sandglass_kernel, H=H, W=W, Cin=Cin, Cout=Cout,
                   stride=stride, use_res=use_res, n_img=n_img, pg=pg)

    # FLOPs the kernel actually executes (lane-group matmul does pg x the
    # minimal 1x1 MACs) and bytes for the shrunken weights.
    flops = (2 * B * H * W * pg * Cin * Cout           # fused 1x1 on the MXU
             + 2 * 9 * B * H * W * (Cin + Cout))       # two depthwise 3x3
    bytes_accessed = 4 * (x2d.size + G * n_img * Ho * Wo * Cout
                          + folded['w1t'].size + folded['b1t'].size
                          + folded['wf'].size + folded['bf'].size
                          + folded['w2t'].size + folded['b4t'].size)

    # NOTE: weights are tiny (<100 KiB total) so default scoped VMEM is ample;
    # set vmem_limit_bytes explicitly only when scaling H/W/C up.
    out = pl.pallas_call(
        kern,
        out_shape=jax.ShapeDtypeStruct((G, n_img * Ho, Wo * Cout), x.dtype),
        grid_spec=pltpu.PrefetchScalarGridSpec(
            num_scalar_prefetch=0,
            grid=(G,),
            in_specs=[
                pl.BlockSpec((1, n_img * H, W * Cin), lambda g: (g, 0, 0)),
                pl.BlockSpec((9, W * Cin), lambda g: (0, 0)),
                pl.BlockSpec((1, W * Cin), lambda g: (0, 0)),
                pl.BlockSpec((pg * Cin, pg * Cout), lambda g: (0, 0)),
                pl.BlockSpec((1, W * Cout), lambda g: (0, 0)),
                pl.BlockSpec((9, W * Cout), lambda g: (0, 0)),
                pl.BlockSpec((1, W * Cout), lambda g: (0, 0)),
            ],
            out_specs=pl.BlockSpec((1, n_img * Ho, Wo * Cout), lambda g: (g, 0, 0)),
        ),
        compiler_params=pltpu.CompilerParams(dimension_semantics=("parallel",)),
        cost_estimate=pl.CostEstimate(flops=flops, transcendentals=0,
                                      bytes_accessed=bytes_accessed),
    )(x2d, folded['w1t'], folded['b1t'], folded['wf'], folded['bf'],
      folded['w2t'], folded['b4t'])

    out = out.reshape(B, Ho, Wo, Cout)
    return jnp.transpose(out, (0, 3, 1, 2))                  # NHWC -> NCHW


# ------------------------- deterministic parameters ------------------------ #
def init_params(key, inp, oup, hidden, dtype=jnp.float32):
    ks = jax.random.split(key, 20)

    def bn_fold(k0, k1, k2, k3, c):
        gamma = jax.random.uniform(k0, (c,), dtype, 0.5, 1.5)
        beta = jax.random.normal(k1, (c,), dtype) * 0.1
        mean = jax.random.normal(k2, (c,), dtype) * 0.1
        var = jax.random.uniform(k3, (c,), dtype, 0.5, 1.5)
        s = gamma / jnp.sqrt(var + 1e-5)
        b = beta - mean * s
        return s.reshape(1, c), b.reshape(1, c)

    p = {}
    # PyTorch depthwise weight (C,1,3,3) stored here as (9, C): w[ky*3+kx, c]
    p['w_dw1'] = jax.random.normal(ks[0], (9, inp), dtype) * 0.2
    p['bn1_s'], p['bn1_b'] = bn_fold(ks[1], ks[2], ks[3], ks[4], inp)
    # 1x1 conv (hidden, inp, 1, 1) stored as (inp, hidden)
    p['w_e'] = jax.random.normal(ks[5], (inp, hidden), dtype) / math.sqrt(inp)
    p['bn2_s'], p['bn2_b'] = bn_fold(ks[6], ks[7], ks[8], ks[9], hidden)
    # 1x1 conv (oup, hidden, 1, 1) stored as (hidden, oup)
    p['w_p'] = jax.random.normal(ks[10], (hidden, oup), dtype) / math.sqrt(hidden)
    p['bn3_s'], p['bn3_b'] = bn_fold(ks[11], ks[12], ks[13], ks[14], oup)
    p['w_dw2'] = jax.random.normal(ks[15], (9, oup), dtype) * 0.2
    p['bn4_s'], p['bn4_b'] = bn_fold(ks[16], ks[17], ks[18], ks[19], oup)
    return p


# ------------------------ pure-JAX reference (check) ----------------------- #
def sandglass_ref(x_nchw, params, *, stride, use_res):
    x = jnp.transpose(x_nchw, (0, 2, 3, 1))
    B, H, W, Cin = x.shape
    xpad = jnp.pad(x, ((0, 0), (1, 1), (1, 1), (0, 0)))
    acc = sum(xpad[:, ky:ky + H, kx:kx + W, :] * params['w_dw1'][ky * 3 + kx]
              for ky in range(3) for kx in range(3))
    y = jnp.clip(acc * params['bn1_s'][0] + params['bn1_b'][0], 0.0, 6.0)
    h = jnp.einsum('bhwc,cd->bhwd', y, params['w_e'])
    h = h * params['bn2_s'][0] + params['bn2_b'][0]
    p = jnp.einsum('bhwc,cd->bhwd', h, params['w_p'])
    p = jnp.clip(p * params['bn3_s'][0] + params['bn3_b'][0], 0.0, 6.0)
    ppad = jnp.pad(p, ((0, 0), (1, 1), (1, 1), (0, 0)))
    acc2 = sum(ppad[:, ky:ky + H, kx:kx + W, :] * params['w_dw2'][ky * 3 + kx]
               for ky in range(3) for kx in range(3))
    out = acc2 * params['bn4_s'][0] + params['bn4_b'][0]
    if stride == 2:
        out = out[:, ::2, ::2, :]
    if use_res:
        out = out + x
    return jnp.transpose(out, (0, 3, 1, 2))


# ---------------------------------- main ----------------------------------- #
if __name__ == "__main__":
    # Module configuration (small, forward-consistent)
    B, inp, oup, H, W = 2, 32, 32, 16, 16
    stride = 1
    expand_ratio = 2               # != 1 -> the 1x1 expand conv exists
    identity_tensor_multiplier = 1.0

    # hidden_dim exactly as in SandGlass.__init__
    hidden_dim = inp // expand_ratio
    if hidden_dim < oup / 6.0:
        hidden_dim = math.ceil(oup / 6.0)
        hidden_dim = _make_divisible(hidden_dim, 16)
    use_res = (stride == 1 and inp == oup)
    # TODO(synk): expand_ratio == 1 variant (no 1x1 expand conv) not wired up here.

    key = jax.random.PRNGKey(0)
    kx, kp = jax.random.split(key)
    x = jax.random.normal(kx, (B, inp, H, W), jnp.float32)   # NCHW like PyTorch
    params = init_params(kp, inp, oup, hidden_dim)

    folded = fold_sandglass_params(params, W=W)              # once, outside forward
    n_img = _images_per_step(B)                              # batch collapse on 1-TC chips

    out = sandglass_forward(x, folded, stride=stride, use_res=use_res,
                            images_per_step=n_img)
    out = jax.block_until_ready(out)

    ref = sandglass_ref(x, params, stride=stride, use_res=use_res)
    assert out.shape == ref.shape
    assert jnp.allclose(out, ref, atol=1e-3, rtol=1e-3), "mismatch vs JAX reference"

    print("KERNEL_OK")
</pallas_src>

<mosaic_0001>
module attributes {stable_mosaic.version = 11 : i64} {
  func.func @sandglass_kernel(%arg0: i32, %arg1: memref<1x32x512xf32, #tpu.memory_space<vmem>>, %arg2: memref<9x512xf32, #tpu.memory_space<vmem>>, %arg3: memref<1x512xf32, #tpu.memory_space<vmem>>, %arg4: memref<128x128xf32, #tpu.memory_space<vmem>>, %arg5: memref<1x512xf32, #tpu.memory_space<vmem>>, %arg6: memref<9x512xf32, #tpu.memory_space<vmem>>, %arg7: memref<1x512xf32, #tpu.memory_space<vmem>>, %arg8: memref<1x32x512xf32, #tpu.memory_space<vmem>>) attributes {dimension_semantics = [#tpu.dimension_semantics<parallel>], iteration_bounds = array<i64: 1>, scalar_prefetch = 0 : i64, scratch_operands = 0 : i64, tpu.core_type = #tpu.core_type<tc>, window_params = [{transform_indices = @transform_0, window_bounds = array<i64: 1, 32, 512>}, {pipeline_mode = #tpu.pipeline_mode<synchronous>, transform_indices = @transform_1, window_bounds = array<i64: 9, 512>}, {pipeline_mode = #tpu.pipeline_mode<synchronous>, transform_indices = @transform_2, window_bounds = array<i64: 1, 512>}, {pipeline_mode = #tpu.pipeline_mode<synchronous>, transform_indices = @transform_3, window_bounds = array<i64: 128, 128>}, {pipeline_mode = #tpu.pipeline_mode<synchronous>, transform_indices = @transform_4, window_bounds = array<i64: 1, 512>}, {pipeline_mode = #tpu.pipeline_mode<synchronous>, transform_indices = @transform_5, window_bounds = array<i64: 9, 512>}, {pipeline_mode = #tpu.pipeline_mode<synchronous>, transform_indices = @transform_6, window_bounds = array<i64: 1, 512>}, {transform_indices = @transform_7, window_bounds = array<i64: 1, 32, 512>}]} {
    %0 = tpu.iota {dimensions = array<i32: 0>} : vector<32x1xi32>
    %c16_i32 = arith.constant 16 : i32
    %c0_i32 = arith.constant 0 : i32
    %1 = arith.cmpi eq, %c16_i32, %c0_i32 : i32
    %c1_i32 = arith.constant 1 : i32
    %2 = arith.select %1, %c1_i32, %c16_i32 : i32
    %3 = vector.broadcast %2 : i32 to vector<32x1xi32>
    %4 = arith.remsi %0, %3 : vector<32x1xi32>
    %c0_i32_0 = arith.constant 0 : i32
    %5 = vector.broadcast %c0_i32_0 : i32 to vector<32x1xi32>
    %6 = arith.cmpi ne, %4, %5 : vector<32x1xi32>
    %c0_i32_1 = arith.constant 0 : i32
    %7 = vector.broadcast %c0_i32_1 : i32 to vector<32x1xi32>
    %8 = arith.cmpi slt, %4, %7 : vector<32x1xi32>
    %c0_i32_2 = arith.constant 0 : i32
    %9 = arith.cmpi slt, %2, %c0_i32_2 : i32
    %10 = vector.broadcast %9 : i1 to vector<32x1xi1>
    %11 = vector.broadcast %10 : vector<32x1xi1> to vector<32x1xi1>
    %12 = arith.xori %8, %11 : vector<32x1xi1>
    %13 = arith.andi %12, %6 : vector<32x1xi1>
    %14 = vector.broadcast %2 : i32 to vector<32x1xi32>
    %15 = arith.addi %4, %14 : vector<32x1xi32>
    %16 = arith.select %13, %15, %4 : vector<32x1xi1>, vector<32x1xi32>
    %c1_i32_3 = arith.constant 1 : i32
    %17 = vector.broadcast %c1_i32_3 : i32 to vector<32x1xi32>
    %18 = arith.cmpi sge, %16, %17 : vector<32x1xi32>
    %c14_i32 = arith.constant 14 : i32
    %19 = vector.broadcast %c14_i32 : i32 to vector<32x1xi32>
    %20 = arith.cmpi sle, %16, %19 : vector<32x1xi32>
    %c0 = arith.constant 0 : index
    %c0_4 = arith.constant 0 : index
    %c0_5 = arith.constant 0 : index
    %21 = vector.load %arg1[%c0, %c0_4, %c0_5] : memref<1x32x512xf32, #tpu.memory_space<vmem>>, vector<1x32x512xf32>
    %22 = vector.shape_cast %21 : vector<1x32x512xf32> to vector<32x512xf32>
    %c1_i32_6 = arith.constant 1 : i32
    %23 = tpu.dynamic_rotate %22 by %c1_i32_6 dim 0 : vector<32x512xf32>, i32 -> vector<32x512xf32>
    %cst = arith.constant 0.000000e+00 : f32
    %24 = vector.shape_cast %18 : vector<32x1xi1> to vector<32x1xi1>
    %25 = vector.broadcast %24 : vector<32x1xi1> to vector<32x512xi1>
    %26 = vector.broadcast %cst : f32 to vector<32x512xf32>
    %27 = arith.select %25, %23, %26 : vector<32x512xi1>, vector<32x512xf32>
    %c31_i32 = arith.constant 31 : i32
    %28 = tpu.dynamic_rotate %22 by %c31_i32 dim 0 : vector<32x512xf32>, i32 -> vector<32x512xf32>
    %cst_7 = arith.constant 0.000000e+00 : f32
    %29 = vector.shape_cast %20 : vector<32x1xi1> to vector<32x1xi1>
    %30 = vector.broadcast %29 : vector<32x1xi1> to vector<32x512xi1>
    %31 = vector.broadcast %cst_7 : f32 to vector<32x512xf32>
    %32 = arith.select %30, %28, %31 : vector<32x512xi1>, vector<32x512xf32>
    %c32_i32 = arith.constant 32 : i32
    %33 = tpu.dynamic_rotate %27 by %c32_i32 dim 1 : vector<32x512xf32>, i32 -> vector<32x512xf32>
    %c0_8 = arith.constant 0 : index
    %c0_9 = arith.constant 0 : index
    %34 = vector.load %arg2[%c0_8, %c0_9] : memref<9x512xf32, #tpu.memory_space<vmem>>, vector<1x512xf32>
    %35 = vector.shape_cast %34 : vector<1x512xf32> to vector<512xf32>
    %36 = vector.shape_cast %35 : vector<512xf32> to vector<1x512xf32>
    %37 = vector.broadcast %36 : vector<1x512xf32> to vector<32x512xf32>
    %38 = arith.mulf %33, %37 : vector<32x512xf32>
    %c1 = arith.constant 1 : index
    %c0_10 = arith.constant 0 : index
    %39 = vector.load %arg2[%c1, %c0_10] : memref<9x512xf32, #tpu.memory_space<vmem>>, vector<1x512xf32>
    %40 = vector.shape_cast %39 : vector<1x512xf32> to vector<512xf32>
    %41 = vector.shape_cast %40 : vector<512xf32> to vector<1x512xf32>
    %42 = vector.broadcast %41 : vector<1x512xf32> to vector<32x512xf32>
    %43 = arith.mulf %27, %42 : vector<32x512xf32>
    %44 = arith.addf %38, %43 : vector<32x512xf32>
    %c480_i32 = arith.constant 480 : i32
    %45 = tpu.dynamic_rotate %27 by %c480_i32 dim 1 : vector<32x512xf32>, i32 -> vector<32x512xf32>
    %c2 = arith.constant 2 : index
    %c0_11 = arith.constant 0 : index
    %46 = vector.load %arg2[%c2, %c0_11] : memref<9x512xf32, #tpu.memory_space<vmem>>, vector<1x512xf32>
    %47 = vector.shape_cast %46 : vector<1x512xf32> to vector<512xf32>
    %48 = vector.shape_cast %47 : vector<512xf32> to vector<1x512xf32>
    %49 = vector.broadcast %48 : vector<1x512xf32> to vector<32x512xf32>
    %50 = arith.mulf %45, %49 : vector<32x512xf32>
    %51 = arith.addf %44, %50 : vector<32x512xf32>
    %c32_i32_12 = arith.constant 32 : i32
    %52 = tpu.dynamic_rotate %22 by %c32_i32_12 dim 1 : vector<32x512xf32>, i32 -> vector<32x512xf32>
    %c3 = arith.constant 3 : index
    %c0_13 = arith.constant 0 : index
    %53 = vector.load %arg2[%c3, %c0_13] : memref<9x512xf32, #tpu.memory_space<vmem>>, vector<1x512xf32>
    %54 = vector.shape_cast %53 : vector<1x512xf32> to vector<512xf32>
    %55 = vector.shape_cast %54 : vector<512xf32> to vector<1x512xf32>
    %56 = vector.broadcast %55 : vector<1x512xf32> to vector<32x512xf32>
    %57 = arith.mulf %52, %56 : vector<32x512xf32>
    %c4 = arith.constant 4 : index
    %c0_14 = arith.constant 0 : index
    %58 = vector.load %arg2[%c4, %c0_14] : memref<9x512xf32, #tpu.memory_space<vmem>>, vector<1x512xf32>
    %59 = vector.shape_cast %58 : vector<1x512xf32> to vector<512xf32>
    %60 = vector.shape_cast %59 : vector<512xf32> to vector<1x512xf32>
    %61 = vector.broadcast %60 : vector<1x512xf32> to vector<32x512xf32>
    %62 = arith.mulf %22, %61 : vector<32x512xf32>
    %63 = arith.addf %57, %62 : vector<32x512xf32>
    %c480_i32_15 = arith.constant 480 : i32
    %64 = tpu.dynamic_rotate %22 by %c480_i32_15 dim 1 : vector<32x512xf32>, i32 -> vector<32x512xf32>
    %c5 = arith.constant 5 : index
    %c0_16 = arith.constant 0 : index
    %65 = vector.load %arg2[%c5, %c0_16] : memref<9x512xf32, #tpu.memory_space<vmem>>, vector<1x512xf32>
    %66 = vector.shape_cast %65 : vector<1x512xf32> to vector<512xf32>
    %67 = vector.shape_cast %66 : vector<512xf32> to vector<1x512xf32>
    %68 = vector.broadcast %67 : vector<1x512xf32> to vector<32x512xf32>
    %69 = arith.mulf %64, %68 : vector<32x512xf32>
    %70 = arith.addf %63, %69 : vector<32x512xf32>
    %71 = arith.addf %51, %70 : vector<32x512xf32>
    %c32_i32_17 = arith.constant 32 : i32
    %72 = tpu.dynamic_rotate %32 by %c32_i32_17 dim 1 : vector<32x512xf32>, i32 -> vector<32x512xf32>
    %c6 = arith.constant 6 : index
    %c0_18 = arith.constant 0 : index
    %73 = vector.load %arg2[%c6, %c0_18] : memref<9x512xf32, #tpu.memory_space<vmem>>, vector<1x512xf32>
    %74 = vector.shape_cast %73 : vector<1x512xf32> to vector<512xf32>
    %75 = vector.shape_cast %74 : vector<512xf32> to vector<1x512xf32>
    %76 = vector.broadcast %75 : vector<1x512xf32> to vector<32x512xf32>
    %77 = arith.mulf %72, %76 : vector<32x512xf32>
    %c7 = arith.constant 7 : index
    %c0_19 = arith.constant 0 : index
    %78 = vector.load %arg2[%c7, %c0_19] : memref<9x512xf32, #tpu.memory_space<vmem>>, vector<1x512xf32>
    %79 = vector.shape_cast %78 : vector<1x512xf32> to vector<512xf32>
    %80 = vector.shape_cast %79 : vector<512xf32> to vector<1x512xf32>
    %81 = vector.broadcast %80 : vector<1x512xf32> to vector<32x512xf32>
    %82 = arith.mulf %32, %81 : vector<32x512xf32>
    %83 = arith.addf %77, %82 : vector<32x512xf32>
    %c480_i32_20 = arith.constant 480 : i32
    %84 = tpu.dynamic_rotate %32 by %c480_i32_20 dim 1 : vector<32x512xf32>, i32 -> vector<32x512xf32>
    %c8 = arith.constant 8 : index
    %c0_21 = arith.constant 0 : index
    %85 = vector.load %arg2[%c8, %c0_21] : memref<9x512xf32, #tpu.memory_space<vmem>>, vector<1x512xf32>
    %86 = vector.shape_cast %85 : vector<1x512xf32> to vector<512xf32>
    %87 = vector.shape_cast %86 : vector<512xf32> to vector<1x512xf32>
    %88 = vector.broadcast %87 : vector<1x512xf32> to vector<32x512xf32>
    %89 = arith.mulf %84, %88 : vector<32x512xf32>
    %90 = arith.addf %83, %89 : vector<32x512xf32>
    %91 = arith.addf %71, %90 : vector<32x512xf32>
    %c0_22 = arith.constant 0 : index
    %c0_23 = arith.constant 0 : index
    %92 = vector.load %arg3[%c0_22, %c0_23] : memref<1x512xf32, #tpu.memory_space<vmem>>, vector<1x512xf32>
    %93 = vector.shape_cast %92 : vector<1x512xf32> to vector<512xf32>
    %94 = vector.shape_cast %93 : vector<512xf32> to vector<1x512xf32>
    %95 = vector.broadcast %94 : vector<1x512xf32> to vector<32x512xf32>
    %96 = arith.addf %91, %95 : vector<32x512xf32>
    %cst_24 = arith.constant 0.000000e+00 : f32
    %cst_25 = arith.constant 6.000000e+00 : f32
    %97 = vector.broadcast %cst_24 : f32 to vector<32x512xf32>
    %98 = arith.maximumf %97, %96 : vector<32x512xf32>
    %99 = vector.broadcast %cst_25 : f32 to vector<32x512xf32>
    %100 = arith.minimumf %99, %98 : vector<32x512xf32>
    %c0_26 = arith.constant 0 : index
    %c0_27 = arith.constant 0 : index
    %101 = vector.load %arg4[%c0_26, %c0_27] : memref<128x128xf32, #tpu.memory_space<vmem>>, vector<128x128xf32>
    %102 = vector.extract_strided_slice %100 {offsets = [0, 0], sizes = [32, 128], strides = [1, 1]} : vector<32x512xf32> to vector<32x128xf32>
    %cst_28 = arith.constant dense<0.000000e+00> : vector<32x128xf32>
    %103 = tpu.matmul %102, %101, %cst_28 {dimension_numbers = #tpu.dot_dimension_numbers<[1], [0], [0], [1], [0, 0, 1, 1], [], []>} : vector<32x128xf32>, vector<128x128xf32>, vector<32x128xf32> -> vector<32x128xf32>
    %104 = vector.extract_strided_slice %100 {offsets = [0, 128], sizes = [32, 128], strides = [1, 1]} : vector<32x512xf32> to vector<32x128xf32>
    %cst_29 = arith.constant dense<0.000000e+00> : vector<32x128xf32>
    %105 = tpu.matmul %104, %101, %cst_29 {dimension_numbers = #tpu.dot_dimension_numbers<[1], [0], [0], [1], [0, 0, 1, 1], [], []>} : vector<32x128xf32>, vector<128x128xf32>, vector<32x128xf32> -> vector<32x128xf32>
    %106 = vector.extract_strided_slice %100 {offsets = [0, 256], sizes = [32, 128], strides = [1, 1]} : vector<32x512xf32> to vector<32x128xf32>
    %cst_30 = arith.constant dense<0.000000e+00> : vector<32x128xf32>
    %107 = tpu.matmul %106, %101, %cst_30 {dimension_numbers = #tpu.dot_dimension_numbers<[1], [0], [0], [1], [0, 0, 1, 1], [], []>} : vector<32x128xf32>, vector<128x128xf32>, vector<32x128xf32> -> vector<32x128xf32>
    %108 = vector.extract_strided_slice %100 {offsets = [0, 384], sizes = [32, 128], strides = [1, 1]} : vector<32x512xf32> to vector<32x128xf32>
    %cst_31 = arith.constant dense<0.000000e+00> : vector<32x128xf32>
    %109 = tpu.matmul %108, %101, %cst_31 {dimension_numbers = #tpu.dot_dimension_numbers<[1], [0], [0], [1], [0, 0, 1, 1], [], []>} : vector<32x128xf32>, vector<128x128xf32>, vector<32x128xf32> -> vector<32x128xf32>
    %110 = tpu.concatenate %103, %105, %107, %109 in 1 : vector<32x128xf32>, vector<32x128xf32>, vector<32x128xf32>, vector<32x128xf32> -> vector<32x512xf32>
    %c0_32 = arith.constant 0 : index
    %c0_33 = arith.constant 0 : index
    %111 = vector.load %arg5[%c0_32, %c0_33] : memref<1x512xf32, #tpu.memory_space<vmem>>, vector<1x512xf32>
    %112 = vector.shape_cast %111 : vector<1x512xf32> to vector<512xf32>
    %113 = vector.shape_cast %112 : vector<512xf32> to vector<1x512xf32>
    %114 = vector.broadcast %113 : vector<1x512xf32> to vector<32x512xf32>
    %115 = arith.addf %110, %114 : vector<32x512xf32>
    %cst_34 = arith.constant 0.000000e+00 : f32
    %cst_35 = arith.constant 6.000000e+00 : f32
    %116 = vector.broadcast %cst_34 : f32 to vector<32x512xf32>
    %117 = arith.maximumf %116, %115 : vector<32x512xf32>
    %118 = vector.broadcast %cst_35 : f32 to vector<32x512xf32>
    %119 = arith.minimumf %118, %117 : vector<32x512xf32>
    %c1_i32_36 = arith.constant 1 : i32
    %120 = tpu.dynamic_rotate %119 by %c1_i32_36 dim 0 : vector<32x512xf32>, i32 -> vector<32x512xf32>
    %cst_37 = arith.constant 0.000000e+00 : f32
    %121 = vector.shape_cast %18 : vector<32x1xi1> to vector<32x1xi1>
    %122 = vector.broadcast %121 : vector<32x1xi1> to vector<32x512xi1>
    %123 = vector.broadcast %cst_37 : f32 to vector<32x512xf32>
    %124 = arith.select %122, %120, %123 : vector<32x512xi1>, vector<32x512xf32>
    %c31_i32_38 = arith.constant 31 : i32
    %125 = tpu.dynamic_rotate %119 by %c31_i32_38 dim 0 : vector<32x512xf32>, i32 -> vector<32x512xf32>
    %cst_39 = arith.constant 0.000000e+00 : f32
    %126 = vector.shape_cast %20 : vector<32x1xi1> to vector<32x1xi1>
    %127 = vector.broadcast %126 : vector<32x1xi1> to vector<32x512xi1>
    %128 = vector.broadcast %cst_39 : f32 to vector<32x512xf32>
    %129 = arith.select %127, %125, %128 : vector<32x512xi1>, vector<32x512xf32>
    %c32_i32_40 = arith.constant 32 : i32
    %130 = tpu.dynamic_rotate %124 by %c32_i32_40 dim 1 : vector<32x512xf32>, i32 -> vector<32x512xf32>
    %c0_41 = arith.constant 0 : index
    %c0_42 = arith.constant 0 : index
    %131 = vector.load %arg6[%c0_41, %c0_42] : memref<9x512xf32, #tpu.memory_space<vmem>>, vector<1x512xf32>
    %132 = vector.shape_cast %131 : vector<1x512xf32> to vector<512xf32>
    %133 = vector.shape_cast %132 : vector<512xf32> to vector<1x512xf32>
    %134 = vector.broadcast %133 : vector<1x512xf32> to vector<32x512xf32>
    %135 = arith.mulf %130, %134 : vector<32x512xf32>
    %c1_43 = arith.constant 1 : index
    %c0_44 = arith.constant 0 : index
    %136 = vector.load %arg6[%c1_43, %c0_44] : memref<9x512xf32, #tpu.memory_space<vmem>>, vector<1x512xf32>
    %137 = vector.shape_cast %136 : vector<1x512xf32> to vector<512xf32>
    %138 = vector.shape_cast %137 : vector<512xf32> to vector<1x512xf32>
    %139 = vector.broadcast %138 : vector<1x512xf32> to vector<32x512xf32>
    %140 = arith.mulf %124, %139 : vector<32x512xf32>
    %141 = arith.addf %135, %140 : vector<32x512xf32>
    %c480_i32_45 = arith.constant 480 : i32
    %142 = tpu.dynamic_rotate %124 by %c480_i32_45 dim 1 : vector<32x512xf32>, i32 -> vector<32x512xf32>
    %c2_46 = arith.constant 2 : index
    %c0_47 = arith.constant 0 : index
    %143 = vector.load %arg6[%c2_46, %c0_47] : memref<9x512xf32, #tpu.memory_space<vmem>>, vector<1x512xf32>
    %144 = vector.shape_cast %143 : vector<1x512xf32> to vector<512xf32>
    %145 = vector.shape_cast %144 : vector<512xf32> to vector<1x512xf32>
    %146 = vector.broadcast %145 : vector<1x512xf32> to vector<32x512xf32>
    %147 = arith.mulf %142, %146 : vector<32x512xf32>
    %148 = arith.addf %141, %147 : vector<32x512xf32>
    %c32_i32_48 = arith.constant 32 : i32
    %149 = tpu.dynamic_rotate %119 by %c32_i32_48 dim 1 : vector<32x512xf32>, i32 -> vector<32x512xf32>
    %c3_49 = arith.constant 3 : index
    %c0_50 = arith.constant 0 : index
    %150 = vector.load %arg6[%c3_49, %c0_50] : memref<9x512xf32, #tpu.memory_space<vmem>>, vector<1x512xf32>
    %151 = vector.shape_cast %150 : vector<1x512xf32> to vector<512xf32>
    %152 = vector.shape_cast %151 : vector<512xf32> to vector<1x512xf32>
    %153 = vector.broadcast %152 : vector<1x512xf32> to vector<32x512xf32>
    %154 = arith.mulf %149, %153 : vector<32x512xf32>
    %c4_51 = arith.constant 4 : index
    %c0_52 = arith.constant 0 : index
    %155 = vector.load %arg6[%c4_51, %c0_52] : memref<9x512xf32, #tpu.memory_space<vmem>>, vector<1x512xf32>
    %156 = vector.shape_cast %155 : vector<1x512xf32> to vector<512xf32>
    %157 = vector.shape_cast %156 : vector<512xf32> to vector<1x512xf32>
    %158 = vector.broadcast %157 : vector<1x512xf32> to vector<32x512xf32>
    %159 = arith.mulf %119, %158 : vector<32x512xf32>
    %160 = arith.addf %154, %159 : vector<32x512xf32>
    %c480_i32_53 = arith.constant 480 : i32
    %161 = tpu.dynamic_rotate %119 by %c480_i32_53 dim 1 : vector<32x512xf32>, i32 -> vector<32x512xf32>
    %c5_54 = arith.constant 5 : index
    %c0_55 = arith.constant 0 : index
    %162 = vector.load %arg6[%c5_54, %c0_55] : memref<9x512xf32, #tpu.memory_space<vmem>>, vector<1x512xf32>
    %163 = vector.shape_cast %162 : vector<1x512xf32> to vector<512xf32>
    %164 = vector.shape_cast %163 : vector<512xf32> to vector<1x512xf32>
    %165 = vector.broadcast %164 : vector<1x512xf32> to vector<32x512xf32>
    %166 = arith.mulf %161, %165 : vector<32x512xf32>
    %167 = arith.addf %160, %166 : vector<32x512xf32>
    %168 = arith.addf %148, %167 : vector<32x512xf32>
    %c32_i32_56 = arith.constant 32 : i32
    %169 = tpu.dynamic_rotate %129 by %c32_i32_56 dim 1 : vector<32x512xf32>, i32 -> vector<32x512xf32>
    %c6_57 = arith.constant 6 : index
    %c0_58 = arith.constant 0 : index
    %170 = vector.load %arg6[%c6_57, %c0_58] : memref<9x512xf32, #tpu.memory_space<vmem>>, vector<1x512xf32>
    %171 = vector.shape_cast %170 : vector<1x512xf32> to vector<512xf32>
    %172 = vector.shape_cast %171 : vector<512xf32> to vector<1x512xf32>
    %173 = vector.broadcast %172 : vector<1x512xf32> to vector<32x512xf32>
    %174 = arith.mulf %169, %173 : vector<32x512xf32>
    %c7_59 = arith.constant 7 : index
    %c0_60 = arith.constant 0 : index
    %175 = vector.load %arg6[%c7_59, %c0_60] : memref<9x512xf32, #tpu.memory_space<vmem>>, vector<1x512xf32>
    %176 = vector.shape_cast %175 : vector<1x512xf32> to vector<512xf32>
    %177 = vector.shape_cast %176 : vector<512xf32> to vector<1x512xf32>
    %178 = vector.broadcast %177 : vector<1x512xf32> to vector<32x512xf32>
    %179 = arith.mulf %129, %178 : vector<32x512xf32>
    %180 = arith.addf %174, %179 : vector<32x512xf32>
    %c480_i32_61 = arith.constant 480 : i32
    %181 = tpu.dynamic_rotate %129 by %c480_i32_61 dim 1 : vector<32x512xf32>, i32 -> vector<32x512xf32>
    %c8_62 = arith.constant 8 : index
    %c0_63 = arith.constant 0 : index
    %182 = vector.load %arg6[%c8_62, %c0_63] : memref<9x512xf32, #tpu.memory_space<vmem>>, vector<1x512xf32>
    %183 = vector.shape_cast %182 : vector<1x512xf32> to vector<512xf32>
    %184 = vector.shape_cast %183 : vector<512xf32> to vector<1x512xf32>
    %185 = vector.broadcast %184 : vector<1x512xf32> to vector<32x512xf32>
    %186 = arith.mulf %181, %185 : vector<32x512xf32>
    %187 = arith.addf %180, %186 : vector<32x512xf32>
    %188 = arith.addf %168, %187 : vector<32x512xf32>
    %c0_64 = arith.constant 0 : index
    %c0_65 = arith.constant 0 : index
    %189 = vector.load %arg7[%c0_64, %c0_65] : memref<1x512xf32, #tpu.memory_space<vmem>>, vector<1x512xf32>
    %190 = vector.shape_cast %189 : vector<1x512xf32> to vector<512xf32>
    %191 = vector.shape_cast %190 : vector<512xf32> to vector<1x512xf32>
    %192 = vector.broadcast %191 : vector<1x512xf32> to vector<32x512xf32>
    %193 = arith.addf %188, %192 : vector<32x512xf32>
    %194 = arith.addf %193, %22 : vector<32x512xf32>
    %c0_66 = arith.constant 0 : index
    %c0_67 = arith.constant 0 : index
    %c0_68 = arith.constant 0 : index
    %195 = vector.load %arg8[%c0_66, %c0_67, %c0_68] : memref<1x32x512xf32, #tpu.memory_space<vmem>>, vector<1x32x512xf32>
    %196 = vector.shape_cast %195 : vector<1x32x512xf32> to vector<32x512xf32>
    %197 = vector.shape_cast %194 : vector<32x512xf32> to vector<1x32x512xf32>
    tpu.vector_store %arg8[%c0_66, %c0_67, %c0_68], %197 {strides = array<i32>} : memref<1x32x512xf32, #tpu.memory_space<vmem>>, vector<1x32x512xf32>,
    return
  }
  func.func @transform_0(%arg0: i32) -> (i32, i32, i32) {
    %c0_i32 = arith.constant 0 : i32
    %c0_i32_0 = arith.constant 0 : i32
    %c0_i32_1 = arith.constant 0 : i32
    return %arg0, %c0_i32, %c0_i32_0 : i32, i32, i32
  }
  func.func @transform_1(%arg0: i32) -> (i32, i32) {
    %c0_i32 = arith.constant 0 : i32
    %c0_i32_0 = arith.constant 0 : i32
    %c0_i32_1 = arith.constant 0 : i32
    return %c0_i32, %c0_i32_0 : i32, i32
  }
  func.func @transform_2(%arg0: i32) -> (i32, i32) {
    %c0_i32 = arith.constant 0 : i32
    %c0_i32_0 = arith.constant 0 : i32
    %c0_i32_1 = arith.constant 0 : i32
    return %c0_i32, %c0_i32_0 : i32, i32
  }
  func.func @transform_3(%arg0: i32) -> (i32, i32) {
    %c0_i32 = arith.constant 0 : i32
    %c0_i32_0 = arith.constant 0 : i32
    %c0_i32_1 = arith.constant 0 : i32
    return %c0_i32, %c0_i32_0 : i32, i32
  }
  func.func @transform_4(%arg0: i32) -> (i32, i32) {
    %c0_i32 = arith.constant 0 : i32
    %c0_i32_0 = arith.constant 0 : i32
    %c0_i32_1 = arith.constant 0 : i32
    return %c0_i32, %c0_i32_0 : i32, i32
  }
  func.func @transform_5(%arg0: i32) -> (i32, i32) {
    %c0_i32 = arith.constant 0 : i32
    %c0_i32_0 = arith.constant 0 : i32
    %c0_i32_1 = arith.constant 0 : i32
    return %c0_i32, %c0_i32_0 : i32, i32
  }
  func.func @transform_6(%arg0: i32) -> (i32, i32) {
    %c0_i32 = arith.constant 0 : i32
    %c0_i32_0 = arith.constant 0 : i32
    %c0_i32_1 = arith.constant 0 : i32
    return %c0_i32, %c0_i32_0 : i32, i32
  }
  func.func @transform_7(%arg0: i32) -> (i32, i32, i32) {
    %c0_i32 = arith.constant 0 : i32
    %c0_i32_0 = arith.constant 0 : i32
    %c0_i32_1 = arith.constant 0 : i32
    return %arg0, %c0_i32, %c0_i32_0 : i32, i32, i32
  }
}

</mosaic_0001>

<llo_original>
// kernel: sandglass_forward.1
$region0: #{sandglass_forward.1}
  #allocation0 [shape = 'u32[]', space=smem, size = 0x4, offset = 0x4, fixed_abs, tag = 'smem constant byte address 0x4 - core index']
  #allocation1 [shape = 'u32[144,128]{1,0:T(1,128)}', space=vmem, size = 0x12000, scoped, tag = 'internal scratch']
  %s0 = inlined_call_operand.vmem [shape: f32[1,32,512], index: 0, kind: input, shape index: {}]
  %s1 = inlined_call_operand.vmem [shape: f32[9,512], index: 1, kind: input, shape index: {}]
  %s2 = inlined_call_operand.vmem [shape: f32[1,512], index: 2, kind: input, shape index: {}]
  %s3 = inlined_call_operand.vmem [shape: f32[128,128], index: 3, kind: input, shape index: {}]
  %s4 = inlined_call_operand.vmem [shape: f32[1,512], index: 4, kind: input, shape index: {}]
  %s5 = inlined_call_operand.vmem [shape: f32[9,512], index: 5, kind: input, shape index: {}]
  %s6 = inlined_call_operand.vmem [shape: f32[1,512], index: 6, kind: input, shape index: {}]
  %s7 = inlined_call_operand.vmem [shape: f32[1,32,512], index: 7, kind: output, shape index: {}]
  %s8 = sld [smem:[#allocation0]]
  $region38: #{sandglass_forward.1} parent=0
    _
  %s10 = ssub.s32 1, %s8
  %s11 = scalar_select 0, %s10, %s8
  // Predicated region
  $region2: #{sandglass_forward.1} parent=0 // pred_check
    _
  $region3: #{sandglass_forward.1} parent=0 // pred_check_branch
    %13 = sbr.rel (0) target = $region5
  $region4: #{sandglass_forward.1} parent=0 // pred_region
    _
  $region5: #{sandglass_forward.1} parent=0 // pred_fallthru
    _
  // Predicated region
  $region6: #{sandglass_forward.1} parent=0 // pred_check
    _
  $region7: #{sandglass_forward.1} parent=0 // pred_check_branch
    %15 = sbr.rel (0) target = $region9
  $region8: #{sandglass_forward.1} parent=0 // pred_region
    _
  $region9: #{sandglass_forward.1} parent=0 // pred_fallthru
    _
  // Predicated region
  $region10: #{sandglass_forward.1} parent=0 // pred_check
    _
  $region11: #{sandglass_forward.1} parent=0 // pred_check_branch
    %17 = sbr.rel (0) target = $region13
  $region12: #{sandglass_forward.1} parent=0 // pred_region
    _
  $region13: #{sandglass_forward.1} parent=0 // pred_fallthru
    _
  // Predicated region
  $region14: #{sandglass_forward.1} parent=0 // pred_check
    _
  $region15: #{sandglass_forward.1} parent=0 // pred_check_branch
    %19 = sbr.rel (0) target = $region17
  $region16: #{sandglass_forward.1} parent=0 // pred_region
    _
  $region17: #{sandglass_forward.1} parent=0 // pred_fallthru
    _
  // Predicated region
  $region18: #{sandglass_forward.1} parent=0 // pred_check
    _
  $region19: #{sandglass_forward.1} parent=0 // pred_check_branch
    %21 = sbr.rel (0) target = $region21
  $region20: #{sandglass_forward.1} parent=0 // pred_region
    _
  $region21: #{sandglass_forward.1} parent=0 // pred_fallthru
    _
  // Predicated region
  $region22: #{sandglass_forward.1} parent=0 // pred_check
    _
  $region23: #{sandglass_forward.1} parent=0 // pred_check_branch
    %23 = sbr.rel (0) target = $region25
  $region24: #{sandglass_forward.1} parent=0 // pred_region
    _
  $region25: #{sandglass_forward.1} parent=0 // pred_fallthru
    _
  // Predicated region
  $region26: #{sandglass_forward.1} parent=0 // pred_check
    _
  $region27: #{sandglass_forward.1} parent=0 // pred_check_branch
    %25 = sbr.rel (0) target = $region29
  $region28: #{sandglass_forward.1} parent=0 // pred_region
    _
  $region29: #{sandglass_forward.1} parent=0 // pred_fallthru
    _
  %v26 = vlaneseq
  %v27 = vshrl.u32 %v26, 7
  %v28 = vadd.s32 %v27, 8
  %v29 = vadd.s32 %v27, 16
  %v30 = vadd.s32 %v27, 24
  %vm31 = vcmp.lt.s32.totalorder %v27, 0
  %v32 = vsub.s32 0, %v27
  %v33 = vsel %vm31, %v32, %v27
  %v34 = vshrl.u32 %v33, 4
  %v35 = vand.u32 %v33, 15
  %v36 = vsub.s32 0, %v35
  %v37 = vsel %vm31, %v36, %v35
  %vm38 = vcmp.lt.s32.totalorder %v28, 0
  %v39 = vsub.s32 0, %v28
  %v40 = vsel %vm38, %v39, %v28
  %v41 = vshrl.u32 %v40, 4
  %v42 = vand.u32 %v40, 15
  %v43 = vsub.s32 0, %v42
  %v44 = vsel %vm38, %v43, %v42
  %vm45 = vcmp.lt.s32.totalorder %v29, 0
  %v46 = vsub.s32 0, %v29
  %v47 = vsel %vm45, %v46, %v29
  %v48 = vshrl.u32 %v47, 4
  %v49 = vand.u32 %v47, 15
  %v50 = vsub.s32 0, %v49
  %v51 = vsel %vm45, %v50, %v49
  %vm52 = vcmp.lt.s32.totalorder %v30, 0
  %v53 = vsub.s32 0, %v30
  %v54 = vsel %vm52, %v53, %v30
  %v55 = vshrl.u32 %v54, 4
  %v56 = vand.u32 %v54, 15
  %v57 = vsub.s32 0, %v56
  %v58 = vsel %vm52, %v57, %v56
  %vm59 = vcmp.ne.s32.totalorder %v37, 0
  %vm60 = vcmp.ne.s32.totalorder %v44, 0
  %vm61 = vcmp.ne.s32.totalorder %v51, 0
  %vm62 = vcmp.ne.s32.totalorder %v58, 0
  %vm63 = vcmp.lt.s32.totalorder %v37, 0
  %vm64 = vcmp.lt.s32.totalorder %v44, 0
  %vm65 = vcmp.lt.s32.totalorder %v51, 0
  %vm66 = vcmp.lt.s32.totalorder %v58, 0
  %vm67 = vmand %vm63, %vm59
  %vm68 = vmand %vm64, %vm60
  %vm69 = vmand %vm65, %vm61
  %vm70 = vmand %vm66, %vm62
  %v71 = vadd.s32 %v37, 16
  %v72 = vadd.s32 %v44, 16
  %v73 = vadd.s32 %v51, 16
  %v74 = vadd.s32 %v58, 16
  %v75 = vsel %vm67, %v71, %v37
  %v76 = vsel %vm68, %v72, %v44
  %v77 = vsel %vm69, %v73, %v51
  %v78 = vsel %vm70, %v74, %v58
  %vm79 = vcmp.ge.s32.totalorder %v75, 1
  %vm80 = vcmp.ge.s32.totalorder %v76, 1
  %vm81 = vcmp.ge.s32.totalorder %v77, 1
  %vm82 = vcmp.ge.s32.totalorder %v78, 1
  %vm83 = vcmp.le.s32.totalorder %v75, 14
  %vm84 = vcmp.le.s32.totalorder %v76, 14
  %vm85 = vcmp.le.s32.totalorder %v77, 14
  %vm86 = vcmp.le.s32.totalorder %v78, 14
  %v87 = vld [vmem:[%s0] sm:$0xff]
  %v88 = vld [vmem:[%s0 + $0x8] sm:$0xff]
  %v89 = vld [vmem:[%s0 + $0x10] sm:$0xff]
  %v90 = vld [vmem:[%s0 + $0x18] sm:$0xff]
  %v91 = vld [vmem:[%s0 + $0x20] sm:$0xff]
  %v92 = vld [vmem:[%s0 + $0x28] sm:$0xff]
  %v93 = vld [vmem:[%s0 + $0x30] sm:$0xff]
  %v94 = vld [vmem:[%s0 + $0x38] sm:$0xff]
  %v95 = vld [vmem:[%s0 + $0x40] sm:$0xff]
  %v96 = vld [vmem:[%s0 + $0x48] sm:$0xff]
  %v97 = vld [vmem:[%s0 + $0x50] sm:$0xff]
  %v98 = vld [vmem:[%s0 + $0x58] sm:$0xff]
  %v99 = vld [vmem:[%s0 + $0x60] sm:$0xff]
  %v100 = vld [vmem:[%s0 + $0x68] sm:$0xff]
  %v101 = vld [vmem:[%s0 + $0x70] sm:$0xff]
  %v102 = vld [vmem:[%s0 + $0x78] sm:$0xff]
  %v103 = vrot.slane %v87, 7
  %v104 = vrot.slane %v88, 7
  %v105 = vrot.slane %v89, 7
  %v106 = vrot.slane %v90, 7
  %v107 = vrot.slane %v91, 7
  %v108 = vrot.slane %v92, 7
  %v109 = vrot.slane %v93, 7
  %v110 = vrot.slane %v94, 7
  %v111 = vrot.slane %v95, 7
  %v112 = vrot.slane %v96, 7
  %v113 = vrot.slane %v97, 7
  %v114 = vrot.slane %v98, 7
  %v115 = vrot.slane %v99, 7
  %v116 = vrot.slane %v100, 7
  %v117 = vrot.slane %v101, 7
  %v118 = vrot.slane %v102, 7
  %vm119 = vcmp.lt.s32.totalorder %v27, 1
  %v120 = vsel %vm119, %v111, %v115
  %v121 = vsel %vm119, %v112, %v116
  %v122 = vsel %vm119, %v113, %v117
  %v123 = vsel %vm119, %v114, %v118
  %v124 = vsel %vm119, %v107, %v111
  %v125 = vsel %vm119, %v108, %v112
  %v126 = vsel %vm119, %v109, %v113
  %v127 = vsel %vm119, %v110, %v114
  %v128 = vsel %vm119, %v103, %v107
  %v129 = vsel %vm119, %v104, %v108
  %v130 = vsel %vm119, %v105, %v109
  %v131 = vsel %vm119, %v106, %v110
  %v132 = vsel %vm119, %v115, %v103
  %v133 = vsel %vm119, %v116, %v104
  %v134 = vsel %vm119, %v117, %v105
  %v135 = vsel %vm119, %v118, %v106
  %v136 = vsel %vm79, 1, 0
  %v137 = vsel %vm80, 1, 0
  %v138 = vsel %vm81, 1, 0
  %v139 = vsel %vm82, 1, 0
  %vm140 = vcmp.eq.s32.totalorder %v136, 1
  %vm141 = vcmp.eq.s32.totalorder %v137, 1
  %vm142 = vcmp.eq.s32.totalorder %v138, 1
  %vm143 = vcmp.eq.s32.totalorder %v139, 1
  %v144 = vsel %vm140, %v132, 0.0
  %v145 = vsel %vm140, %v133, 0.0
  %v146 = vsel %vm140, %v134, 0.0
  %v147 = vsel %vm140, %v135, 0.0
  %v148 = vsel %vm141, %v128, 0.0
  %v149 = vsel %vm141, %v129, 0.0
  %v150 = vsel %vm141, %v130, 0.0
  %v151 = vsel %vm141, %v131, 0.0
  %v152 = vsel %vm142, %v124, 0.0
  %v153 = vsel %vm142, %v125, 0.0
  %v154 = vsel %vm142, %v126, 0.0
  %v155 = vsel %vm142, %v127, 0.0
  %v156 = vsel %vm143, %v120, 0.0
  %v157 = vsel %vm143, %v121, 0.0
  %v158 = vsel %vm143, %v122, 0.0
  %v159 = vsel %vm143, %v123, 0.0
  %v160 = vrot.slane %v87, 1
  %v161 = vrot.slane %v88, 1
  %v162 = vrot.slane %v89, 1
  %v163 = vrot.slane %v90, 1
  %v164 = vrot.slane %v91, 1
  %v165 = vrot.slane %v92, 1
  %v166 = vrot.slane %v93, 1
  %v167 = vrot.slane %v94, 1
  %v168 = vrot.slane %v95, 1
  %v169 = vrot.slane %v96, 1
  %v170 = vrot.slane %v97, 1
  %v171 = vrot.slane %v98, 1
  %v172 = vrot.slane %v99, 1
  %v173 = vrot.slane %v100, 1
  %v174 = vrot.slane %v101, 1
  %v175 = vrot.slane %v102, 1
  %vm176 = vcmp.lt.s32.totalorder %v27, 7
  %v177 = vsel %vm176, %v168, %v172
  %v178 = vsel %vm176, %v169, %v173
  %v179 = vsel %vm176, %v170, %v174
  %v180 = vsel %vm176, %v171, %v175
  %v181 = vsel %vm176, %v164, %v168
  %v182 = vsel %vm176, %v165, %v169
  %v183 = vsel %vm176, %v166, %v170
  %v184 = vsel %vm176, %v167, %v171
  %v185 = vsel %vm176, %v160, %v164
  %v186 = vsel %vm176, %v161, %v165
  %v187 = vsel %vm176, %v162, %v166
  %v188 = vsel %vm176, %v163, %v167
  %v189 = vsel %vm176, %v172, %v160
  %v190 = vsel %vm176, %v173, %v161
  %v191 = vsel %vm176, %v174, %v162
  %v192 = vsel %vm176, %v175, %v163
  %v193 = vsel %vm83, 1, 0
  %v194 = vsel %vm84, 1, 0
  %v195 = vsel %vm85, 1, 0
  %v196 = vsel %vm86, 1, 0
  %vm197 = vcmp.eq.s32.totalorder %v193, 1
  %vm198 = vcmp.eq.s32.totalorder %v194, 1
  %vm199 = vcmp.eq.s32.totalorder %v195, 1
  %vm200 = vcmp.eq.s32.totalorder %v196, 1
  %v201 = vsel %vm197, %v185, 0.0
  %v202 = vsel %vm197, %v186, 0.0
  %v203 = vsel %vm197, %v187, 0.0
  %v204 = vsel %vm197, %v188, 0.0
  %v205 = vsel %vm198, %v181, 0.0
  %v206 = vsel %vm198, %v182, 0.0
  %v207 = vsel %vm198, %v183, 0.0
  %v208 = vsel %vm198, %v184, 0.0
  %v209 = vsel %vm199, %v177, 0.0
  %v210 = vsel %vm199, %v178, 0.0
  %v211 = vsel %vm199, %v179, 0.0
  %v212 = vsel %vm199, %v180, 0.0
  %v213 = vsel %vm200, %v189, 0.0
  %v214 = vsel %vm200, %v190, 0.0
  %v215 = vsel %vm200, %v191, 0.0
  %v216 = vsel %vm200, %v192, 0.0
  %217 = vrot.lane.b32.xlu0 %v144, 32
  %v218 = vpop.permute.xlu0 %217
  %219 = vrot.lane.b32.xlu0 %v148, 32
  %v220 = vpop.permute.xlu0 %219
  %221 = vrot.lane.b32.xlu0 %v152, 32
  %v222 = vpop.permute.xlu0 %221
  %223 = vrot.lane.b32.xlu0 %v156, 32
  %v224 = vpop.permute.xlu0 %223
  %225 = vrot.lane.b32.xlu0 %v145, 32
  %v226 = vpop.permute.xlu0 %225
  %227 = vrot.lane.b32.xlu0 %v149, 32
  %v228 = vpop.permute.xlu0 %227
  %229 = vrot.lane.b32.xlu0 %v153, 32
  %v230 = vpop.permute.xlu0 %229
  %231 = vrot.lane.b32.xlu0 %v157, 32
  %v232 = vpop.permute.xlu0 %231
  %233 = vrot.lane.b32.xlu0 %v146, 32
  %v234 = vpop.permute.xlu0 %233
  %235 = vrot.lane.b32.xlu0 %v150, 32
  %v236 = vpop.permute.xlu0 %235
  %237 = vrot.lane.b32.xlu0 %v154, 32
  %v238 = vpop.permute.xlu0 %237
  %239 = vrot.lane.b32.xlu0 %v158, 32
  %v240 = vpop.permute.xlu0 %239
  %241 = vrot.lane.b32.xlu0 %v147, 32
  %v242 = vpop.permute.xlu0 %241
  %243 = vrot.lane.b32.xlu0 %v151, 32
  %v244 = vpop.permute.xlu0 %243
  %245 = vrot.lane.b32.xlu0 %v155, 32
  %v246 = vpop.permute.xlu0 %245
  %247 = vrot.lane.b32.xlu0 %v159, 32
  %v248 = vpop.permute.xlu0 %247
  %v249 = vlaneseq
  %v250 = vand.u32 %v249, 127
  %vm251 = vcmp.lt.s32.totalorder %v250, 32
  %v252 = vsel %vm251, %v234, %v242
  %v253 = vsel %vm251, %v236, %v244
  %v254 = vsel %vm251, %v238, %v246
  %v255 = vsel %vm251, %v240, %v248
  %v256 = vsel %vm251, %v226, %v234
  %v257 = vsel %vm251, %v228, %v236
  %v258 = vsel %vm251, %v230, %v238
  %v259 = vsel %vm251, %v232, %v240
  %v260 = vsel %vm251, %v218, %v226
  %v261 = vsel %vm251, %v220, %v228
  %v262 = vsel %vm251, %v222, %v230
  %v263 = vsel %vm251, %v224, %v232
  %v264 = vsel %vm251, %v242, %v218
  %v265 = vsel %vm251, %v244, %v220
  %v266 = vsel %vm251, %v246, %v222
  %v267 = vsel %vm251, %v248, %v224
  %v268 = vld [vmem:[%s1] ss:$8 sm:$0xf]
  %v270 = vlaneseq
  %v271 = vshrl.u32 %v270, 7
  %v272 = vsub.s32 0, %v271
  %v273 = vrot.slane %v268, %v272
  %v274 = vlaneseq
  %v275 = vshrl.u32 %v274, 7
  %v276 = vsub.s32 1, %v275
  %v277 = vrot.slane %v268, %v276
  %v278 = vlaneseq
  %v279 = vshrl.u32 %v278, 7
  %v280 = vsub.s32 2, %v279
  %v281 = vrot.slane %v268, %v280
  %v282 = vlaneseq
  %v283 = vshrl.u32 %v282, 7
  %v284 = vsub.s32 3, %v283
  %v285 = vrot.slane %v268, %v284
  %v290 = vmul.f32 %v264, %v273
  %v291 = vmul.f32 %v260, %v277
  %v292 = vmul.f32 %v256, %v281
  %v293 = vmul.f32 %v252, %v285
  %v294 = vmul.f32 %v265, %v273
  %v295 = vmul.f32 %v261, %v277
  %v296 = vmul.f32 %v257, %v281
  %v297 = vmul.f32 %v253, %v285
  %v298 = vmul.f32 %v266, %v273
  %v299 = vmul.f32 %v262, %v277
  %v300 = vmul.f32 %v258, %v281
  %v301 = vmul.f32 %v254, %v285
  %v302 = vmul.f32 %v267, %v273
  %v303 = vmul.f32 %v263, %v277
  %v304 = vmul.f32 %v259, %v281
  %v305 = vmul.f32 %v255, %v285
  %s306 = scalar_lea.vmem %s1, 1
  %v307 = vld [vmem:[%s306] ss:$8 sm:$0xf]
  %v309 = vlaneseq
  %v310 = vshrl.u32 %v309, 7
  %v311 = vsub.s32 0, %v310
  %v312 = vrot.slane %v307, %v311
  %v313 = vlaneseq
  %v314 = vshrl.u32 %v313, 7
  %v315 = vsub.s32 1, %v314
  %v316 = vrot.slane %v307, %v315
  %v317 = vlaneseq
  %v318 = vshrl.u32 %v317, 7
  %v319 = vsub.s32 2, %v318
  %v320 = vrot.slane %v307, %v319
  %v321 = vlaneseq
  %v322 = vshrl.u32 %v321, 7
  %v323 = vsub.s32 3, %v322
  %v324 = vrot.slane %v307, %v323
  %v329 = vmul.f32 %v144, %v312
  %v330 = vmul.f32 %v145, %v316
  %v331 = vmul.f32 %v146, %v320
  %v332 = vmul.f32 %v147, %v324
  %v333 = vmul.f32 %v148, %v312
  %v334 = vmul.f32 %v149, %v316
  %v335 = vmul.f32 %v150, %v320
  %v336 = vmul.f32 %v151, %v324
  %v337 = vmul.f32 %v152, %v312
  %v338 = vmul.f32 %v153, %v316
  %v339 = vmul.f32 %v154, %v320
  %v340 = vmul.f32 %v155, %v324
  %v341 = vmul.f32 %v156, %v312
  %v342 = vmul.f32 %v157, %v316
  %v343 = vmul.f32 %v158, %v320
  %v344 = vmul.f32 %v159, %v324
  %v345 = vadd.f32 %v290, %v329
  %v346 = vadd.f32 %v291, %v330
  %v347 = vadd.f32 %v292, %v331
  %v348 = vadd.f32 %v293, %v332
  %v349 = vadd.f32 %v294, %v333
  %v350 = vadd.f32 %v295, %v334
  %v351 = vadd.f32 %v296, %v335
  %v352 = vadd.f32 %v297, %v336
  %v353 = vadd.f32 %v298, %v337
  %v354 = vadd.f32 %v299, %v338
  %v355 = vadd.f32 %v300, %v339
  %v356 = vadd.f32 %v301, %v340
  %v357 = vadd.f32 %v302, %v341
  %v358 = vadd.f32 %v303, %v342
  %v359 = vadd.f32 %v304, %v343
  %v360 = vadd.f32 %v305, %v344
  %361 = vrot.lane.b32.xlu0 %v144, 96
  %v362 = vpop.permute.xlu0 %361
  %363 = vrot.lane.b32.xlu0 %v148, 96
  %v364 = vpop.permute.xlu0 %363
  %365 = vrot.lane.b32.xlu0 %v152, 96
  %v366 = vpop.permute.xlu0 %365
  %367 = vrot.lane.b32.xlu0 %v156, 96
  %v368 = vpop.permute.xlu0 %367
  %369 = vrot.lane.b32.xlu0 %v145, 96
  %v370 = vpop.permute.xlu0 %369
  %371 = vrot.lane.b32.xlu0 %v149, 96
  %v372 = vpop.permute.xlu0 %371
  %373 = vrot.lane.b32.xlu0 %v153, 96
  %v374 = vpop.permute.xlu0 %373
  %375 = vrot.lane.b32.xlu0 %v157, 96
  %v376 = vpop.permute.xlu0 %375
  %377 = vrot.lane.b32.xlu0 %v146, 96
  %v378 = vpop.permute.xlu0 %377
  %379 = vrot.lane.b32.xlu0 %v150, 96
  %v380 = vpop.permute.xlu0 %379
  %381 = vrot.lane.b32.xlu0 %v154, 96
  %v382 = vpop.permute.xlu0 %381
  %383 = vrot.lane.b32.xlu0 %v158, 96
  %v384 = vpop.permute.xlu0 %383
  %385 = vrot.lane.b32.xlu0 %v147, 96
  %v386 = vpop.permute.xlu0 %385
  %387 = vrot.lane.b32.xlu0 %v151, 96
  %v388 = vpop.permute.xlu0 %387
  %389 = vrot.lane.b32.xlu0 %v155, 96
  %v390 = vpop.permute.xlu0 %389
  %391 = vrot.lane.b32.xlu0 %v159, 96
  %v392 = vpop.permute.xlu0 %391
  %vm393 = vcmp.lt.s32.totalorder %v250, 96
  %v394 = vsel %vm393, %v378, %v386
  %v395 = vsel %vm393, %v380, %v388
  %v396 = vsel %vm393, %v382, %v390
  %v397 = vsel %vm393, %v384, %v392
  %v398 = vsel %vm393, %v370, %v378
  %v399 = vsel %vm393, %v372, %v380
  %v400 = vsel %vm393, %v374, %v382
  %v401 = vsel %vm393, %v376, %v384
  %v402 = vsel %vm393, %v362, %v370
  %v403 = vsel %vm393, %v364, %v372
  %v404 = vsel %vm393, %v366, %v374
  %v405 = vsel %vm393, %v368, %v376
  %v406 = vsel %vm393, %v386, %v362
  %v407 = vsel %vm393, %v388, %v364
  %v408 = vsel %vm393, %v390, %v366
  %v409 = vsel %vm393, %v392, %v368
  %s410 = scalar_lea.vmem %s1, 2
  %v411 = vld [vmem:[%s410] ss:$8 sm:$0xf]
  %v413 = vlaneseq
  %v414 = vshrl.u32 %v413, 7
  %v415 = vsub.s32 0, %v414
  %v416 = vrot.slane %v411, %v415
  %v417 = vlaneseq
  %v418 = vshrl.u32 %v417, 7
  %v419 = vsub.s32 1, %v418
  %v420 = vrot.slane %v411, %v419
  %v421 = vlaneseq
  %v422 = vshrl.u32 %v421, 7
  %v423 = vsub.s32 2, %v422
  %v424 = vrot.slane %v411, %v423
  %v425 = vlaneseq
  %v426 = vshrl.u32 %v425, 7
  %v427 = vsub.s32 3, %v426
  %v428 = vrot.slane %v411, %v427
  %v433 = vmul.f32 %v402, %v416
  %v434 = vmul.f32 %v398, %v420
  %v435 = vmul.f32 %v394, %v424
  %v436 = vmul.f32 %v406, %v428
  %v437 = vmul.f32 %v403, %v416
  %v438 = vmul.f32 %v399, %v420
  %v439 = vmul.f32 %v395, %v424
  %v440 = vmul.f32 %v407, %v428
  %v441 = vmul.f32 %v404, %v416
  %v442 = vmul.f32 %v400, %v420
  %v443 = vmul.f32 %v396, %v424
  %v444 = vmul.f32 %v408, %v428
  %v445 = vmul.f32 %v405, %v416
  %v446 = vmul.f32 %v401, %v420
  %v447 = vmul.f32 %v397, %v424
  %v448 = vmul.f32 %v409, %v428
  %v449 = vadd.f32 %v345, %v433
  %v450 = vadd.f32 %v346, %v434
  %v451 = vadd.f32 %v347, %v435
  %v452 = vadd.f32 %v348, %v436
  %v453 = vadd.f32 %v349, %v437
  %v454 = vadd.f32 %v350, %v438
  %v455 = vadd.f32 %v351, %v439
  %v456 = vadd.f32 %v352, %v440
  %v457 = vadd.f32 %v353, %v441
  %v458 = vadd.f32 %v354, %v442
  %v459 = vadd.f32 %v355, %v443
  %v460 = vadd.f32 %v356, %v444
  %v461 = vadd.f32 %v357, %v445
  %v462 = vadd.f32 %v358, %v446
  %v463 = vadd.f32 %v359, %v447
  %v464 = vadd.f32 %v360, %v448
  %465 = vrot.lane.b32.xlu0 %v87, 32
  %v466 = vpop.permute.xlu0 %465
  %467 = vrot.lane.b32.xlu0 %v91, 32
  %v468 = vpop.permute.xlu0 %467
  %469 = vrot.lane.b32.xlu0 %v95, 32
  %v470 = vpop.permute.xlu0 %469
  %471 = vrot.lane.b32.xlu0 %v99, 32
  %v472 = vpop.permute.xlu0 %471
  %473 = vrot.lane.b32.xlu0 %v88, 32
  %v474 = vpop.permute.xlu0 %473
  %475 = vrot.lane.b32.xlu0 %v92, 32
  %v476 = vpop.permute.xlu0 %475
  %477 = vrot.lane.b32.xlu0 %v96, 32
  %v478 = vpop.permute.xlu0 %477
  %479 = vrot.lane.b32.xlu0 %v100, 32
  %v480 = vpop.permute.xlu0 %479
  %481 = vrot.lane.b32.xlu0 %v89, 32
  %v482 = vpop.permute.xlu0 %481
  %483 = vrot.lane.b32.xlu0 %v93, 32
  %v484 = vpop.permute.xlu0 %483
  %485 = vrot.lane.b32.xlu0 %v97, 32
  %v486 = vpop.permute.xlu0 %485
  %487 = vrot.lane.b32.xlu0 %v101, 32
  %v488 = vpop.permute.xlu0 %487
  %489 = vrot.lane.b32.xlu0 %v90, 32
  %v490 = vpop.permute.xlu0 %489
  %491 = vrot.lane.b32.xlu0 %v94, 32
  %v492 = vpop.permute.xlu0 %491
  %493 = vrot.lane.b32.xlu0 %v98, 32
  %v494 = vpop.permute.xlu0 %493
  %495 = vrot.lane.b32.xlu0 %v102, 32
  %v496 = vpop.permute.xlu0 %495
  %v497 = vsel %vm251, %v482, %v490
  %v498 = vsel %vm251, %v484, %v492
  %v499 = vsel %vm251, %v486, %v494
  %v500 = vsel %vm251, %v488, %v496
  %v501 = vsel %vm251, %v474, %v482
  %v502 = vsel %vm251, %v476, %v484
  %v503 = vsel %vm251, %v478, %v486
  %v504 = vsel %vm251, %v480, %v488
  %v505 = vsel %vm251, %v466, %v474
  %v506 = vsel %vm251, %v468, %v476
  %v507 = vsel %vm251, %v470, %v478
  %v508 = vsel %vm251, %v472, %v480
  %v509 = vsel %vm251, %v490, %v466
  %v510 = vsel %vm251, %v492, %v468
  %v511 = vsel %vm251, %v494, %v470
  %v512 = vsel %vm251, %v496, %v472
  %s513 = scalar_lea.vmem %s1, 3
  %v514 = vld [vmem:[%s513] ss:$8 sm:$0xf]
  %v516 = vlaneseq
  %v517 = vshrl.u32 %v516, 7
  %v518 = vsub.s32 0, %v517
  %v519 = vrot.slane %v514, %v518
  %v520 = vlaneseq
  %v521 = vshrl.u32 %v520, 7
  %v522 = vsub.s32 1, %v521
  %v523 = vrot.slane %v514, %v522
  %v524 = vlaneseq
  %v525 = vshrl.u32 %v524, 7
  %v526 = vsub.s32 2, %v525
  %v527 = vrot.slane %v514, %v526
  %v528 = vlaneseq
  %v529 = vshrl.u32 %v528, 7
  %v530 = vsub.s32 3, %v529
  %v531 = vrot.slane %v514, %v530
  %v536 = vmul.f32 %v509, %v519
  %v537 = vmul.f32 %v505, %v523
  %v538 = vmul.f32 %v501, %v527
  %v539 = vmul.f32 %v497, %v531
  %v540 = vmul.f32 %v510, %v519
  %v541 = vmul.f32 %v506, %v523
  %v542 = vmul.f32 %v502, %v527
  %v543 = vmul.f32 %v498, %v531
  %v544 = vmul.f32 %v511, %v519
  %v545 = vmul.f32 %v507, %v523
  %v546 = vmul.f32 %v503, %v527
  %v547 = vmul.f32 %v499, %v531
  %v548 = vmul.f32 %v512, %v519
  %v549 = vmul.f32 %v508, %v523
  %v550 = vmul.f32 %v504, %v527
  %v551 = vmul.f32 %v500, %v531
  %s552 = scalar_lea.vmem %s1, 4
  %v553 = vld [vmem:[%s552] ss:$8 sm:$0xf]
  %v555 = vlaneseq
  %v556 = vshrl.u32 %v555, 7
  %v557 = vsub.s32 0, %v556
  %v558 = vrot.slane %v553, %v557
  %v559 = vlaneseq
  %v560 = vshrl.u32 %v559, 7
  %v561 = vsub.s32 1, %v560
  %v562 = vrot.slane %v553, %v561
  %v563 = vlaneseq
  %v564 = vshrl.u32 %v563, 7
  %v565 = vsub.s32 2, %v564
  %v566 = vrot.slane %v553, %v565
  %v567 = vlaneseq
  %v568 = vshrl.u32 %v567, 7
  %v569 = vsub.s32 3, %v568
  %v570 = vrot.slane %v553, %v569
  %v575 = vmul.f32 %v87, %v558
  %v576 = vmul.f32 %v88, %v562
  %v577 = vmul.f32 %v89, %v566
  %v578 = vmul.f32 %v90, %v570
  %v579 = vmul.f32 %v91, %v558
  %v580 = vmul.f32 %v92, %v562
  %v581 = vmul.f32 %v93, %v566
  %v582 = vmul.f32 %v94, %v570
  %v583 = vmul.f32 %v95, %v558
  %v584 = vmul.f32 %v96, %v562
  %v585 = vmul.f32 %v97, %v566
  %v586 = vmul.f32 %v98, %v570
  %v587 = vmul.f32 %v99, %v558
  %v588 = vmul.f32 %v100, %v562
  %v589 = vmul.f32 %v101, %v566
  %v590 = vmul.f32 %v102, %v570
  %v591 = vadd.f32 %v536, %v575
  %v592 = vadd.f32 %v537, %v576
  %v593 = vadd.f32 %v538, %v577
  %v594 = vadd.f32 %v539, %v578
  %v595 = vadd.f32 %v540, %v579
  %v596 = vadd.f32 %v541, %v580
  %v597 = vadd.f32 %v542, %v581
  %v598 = vadd.f32 %v543, %v582
  %v599 = vadd.f32 %v544, %v583
  %v600 = vadd.f32 %v545, %v584
  %v601 = vadd.f32 %v546, %v585
  %v602 = vadd.f32 %v547, %v586
  %v603 = vadd.f32 %v548, %v587
  %v604 = vadd.f32 %v549, %v588
  %v605 = vadd.f32 %v550, %v589
  %v606 = vadd.f32 %v551, %v590
  %607 = vrot.lane.b32.xlu0 %v87, 96
  %v608 = vpop.permute.xlu0 %607
  %609 = vrot.lane.b32.xlu0 %v91, 96
  %v610 = vpop.permute.xlu0 %609
  %611 = vrot.lane.b32.xlu0 %v95, 96
  %v612 = vpop.permute.xlu0 %611
  %613 = vrot.lane.b32.xlu0 %v99, 96
  %v614 = vpop.permute.xlu0 %613
  %615 = vrot.lane.b32.xlu0 %v88, 96
  %v616 = vpop.permute.xlu0 %615
  %617 = vrot.lane.b32.xlu0 %v92, 96
  %v618 = vpop.permute.xlu0 %617
  %619 = vrot.lane.b32.xlu0 %v96, 96
  %v620 = vpop.permute.xlu0 %619
  %621 = vrot.lane.b32.xlu0 %v100, 96
  %v622 = vpop.permute.xlu0 %621
  %623 = vrot.lane.b32.xlu0 %v89, 96
  %v624 = vpop.permute.xlu0 %623
  %625 = vrot.lane.b32.xlu0 %v93, 96
  %v626 = vpop.permute.xlu0 %625
  %627 = vrot.lane.b32.xlu0 %v97, 96
  %v628 = vpop.permute.xlu0 %627
  %629 = vrot.lane.b32.xlu0 %v101, 96
  %v630 = vpop.permute.xlu0 %629
  %631 = vrot.lane.b32.xlu0 %v90, 96
  %v632 = vpop.permute.xlu0 %631
  %633 = vrot.lane.b32.xlu0 %v94, 96
  %v634 = vpop.permute.xlu0 %633
  %635 = vrot.lane.b32.xlu0 %v98, 96
  %v636 = vpop.permute.xlu0 %635
  %637 = vrot.lane.b32.xlu0 %v102, 96
  %v638 = vpop.permute.xlu0 %637
  %v639 = vsel %vm393, %v624, %v632
  %v640 = vsel %vm393, %v626, %v634
  %v641 = vsel %vm393, %v628, %v636
  %v642 = vsel %vm393, %v630, %v638
  %v643 = vsel %vm393, %v616, %v624
  %v644 = vsel %vm393, %v618, %v626
  %v645 = vsel %vm393, %v620, %v628
  %v646 = vsel %vm393, %v622, %v630
  %v647 = vsel %vm393, %v608, %v616
  %v648 = vsel %vm393, %v610, %v618
  %v649 = vsel %vm393, %v612, %v620
  %v650 = vsel %vm393, %v614, %v622
  %v651 = vsel %vm393, %v632, %v608
  %v652 = vsel %vm393, %v634, %v610
  %v653 = vsel %vm393, %v636, %v612
  %v654 = vsel %vm393, %v638, %v614
  %s655 = scalar_lea.vmem %s1, 5
  %v656 = vld [vmem:[%s655] ss:$8 sm:$0xf]
  %v658 = vlaneseq
  %v659 = vshrl.u32 %v658, 7
  %v660 = vsub.s32 0, %v659
  %v661 = vrot.slane %v656, %v660
  %v662 = vlaneseq
  %v663 = vshrl.u32 %v662, 7
  %v664 = vsub.s32 1, %v663
  %v665 = vrot.slane %v656, %v664
  %v666 = vlaneseq
  %v667 = vshrl.u32 %v666, 7
  %v668 = vsub.s32 2, %v667
  %v669 = vrot.slane %v656, %v668
  %v670 = vlaneseq
  %v671 = vshrl.u32 %v670, 7
  %v672 = vsub.s32 3, %v671
  %v673 = vrot.slane %v656, %v672
  %v678 = vmul.f32 %v647, %v661
  %v679 = vmul.f32 %v643, %v665
  %v680 = vmul.f32 %v639, %v669
  %v681 = vmul.f32 %v651, %v673
  %v682 = vmul.f32 %v648, %v661
  %v683 = vmul.f32 %v644, %v665
  %v684 = vmul.f32 %v640, %v669
  %v685 = vmul.f32 %v652, %v673
  %v686 = vmul.f32 %v649, %v661
  %v687 = vmul.f32 %v645, %v665
  %v688 = vmul.f32 %v641, %v669
  %v689 = vmul.f32 %v653, %v673
  %v690 = vmul.f32 %v650, %v661
  %v691 = vmul.f32 %v646, %v665
  %v692 = vmul.f32 %v642, %v669
  %v693 = vmul.f32 %v654, %v673
  %v694 = vadd.f32 %v591, %v678
  %v695 = vadd.f32 %v592, %v679
  %v696 = vadd.f32 %v593, %v680
  %v697 = vadd.f32 %v594, %v681
  %v698 = vadd.f32 %v595, %v682
  %v699 = vadd.f32 %v596, %v683
  %v700 = vadd.f32 %v597, %v684
  %v701 = vadd.f32 %v598, %v685
  %v702 = vadd.f32 %v599, %v686
  %v703 = vadd.f32 %v600, %v687
  %v704 = vadd.f32 %v601, %v688
  %v705 = vadd.f32 %v602, %v689
  %v706 = vadd.f32 %v603, %v690
  %v707 = vadd.f32 %v604, %v691
  %v708 = vadd.f32 %v605, %v692
  %v709 = vadd.f32 %v606, %v693
  %v710 = vadd.f32 %v449, %v694
  %v711 = vadd.f32 %v450, %v695
  %v712 = vadd.f32 %v451, %v696
  %v713 = vadd.f32 %v452, %v697
  %v714 = vadd.f32 %v453, %v698
  %v715 = vadd.f32 %v454, %v699
  %v716 = vadd.f32 %v455, %v700
  %v717 = vadd.f32 %v456, %v701
  %v718 = vadd.f32 %v457, %v702
  %v719 = vadd.f32 %v458, %v703
  %v720 = vadd.f32 %v459, %v704
  %v721 = vadd.f32 %v460, %v705
  %v722 = vadd.f32 %v461, %v706
  %v723 = vadd.f32 %v462, %v707
  %v724 = vadd.f32 %v463, %v708
  %v725 = vadd.f32 %v464, %v709
  %726 = vrot.lane.b32.xlu0 %v201, 32
  %v727 = vpop.permute.xlu0 %726
  %728 = vrot.lane.b32.xlu0 %v205, 32
  %v729 = vpop.permute.xlu0 %728
  %730 = vrot.lane.b32.xlu0 %v209, 32
  %v731 = vpop.permute.xlu0 %730
  %732 = vrot.lane.b32.xlu0 %v213, 32
  %v733 = vpop.permute.xlu0 %732
  %734 = vrot.lane.b32.xlu0 %v202, 32
  %v735 = vpop.permute.xlu0 %734
  %736 = vrot.lane.b32.xlu0 %v206, 32
  %v737 = vpop.permute.xlu0 %736
  %738 = vrot.lane.b32.xlu0 %v210, 32
  %v739 = vpop.permute.xlu0 %738
  %740 = vrot.lane.b32.xlu0 %v214, 32
  %v741 = vpop.permute.xlu0 %740
  %742 = vrot.lane.b32.xlu0 %v203, 32
  %v743 = vpop.permute.xlu0 %742
  %744 = vrot.lane.b32.xlu0 %v207, 32
  %v745 = vpop.permute.xlu0 %744
  %746 = vrot.lane.b32.xlu0 %v211, 32
  %v747 = vpop.permute.xlu0 %746
  %748 = vrot.lane.b32.xlu0 %v215, 32
  %v749 = vpop.permute.xlu0 %748
  %750 = vrot.lane.b32.xlu0 %v204, 32
  %v751 = vpop.permute.xlu0 %750
  %752 = vrot.lane.b32.xlu0 %v208, 32
  %v753 = vpop.permute.xlu0 %752
  %754 = vrot.lane.b32.xlu0 %v212, 32
  %v755 = vpop.permute.xlu0 %754
  %756 = vrot.lane.b32.xlu0 %v216, 32
  %v757 = vpop.permute.xlu0 %756
  %v758 = vsel %vm251, %v743, %v751
  %v759 = vsel %vm251, %v745, %v753
  %v760 = vsel %vm251, %v747, %v755
  %v761 = vsel %vm251, %v749, %v757
  %v762 = vsel %vm251, %v735, %v743
  %v763 = vsel %vm251, %v737, %v745
  %v764 = vsel %vm251, %v739, %v747
  %v765 = vsel %vm251, %v741, %v749
  %v766 = vsel %vm251, %v727, %v735
  %v767 = vsel %vm251, %v729, %v737
  %v768 = vsel %vm251, %v731, %v739
  %v769 = vsel %vm251, %v733, %v741
  %v770 = vsel %vm251, %v751, %v727
  %v771 = vsel %vm251, %v753, %v729
  %v772 = vsel %vm251, %v755, %v731
  %v773 = vsel %vm251, %v757, %v733
  %s774 = scalar_lea.vmem %s1, 6
  %v775 = vld [vmem:[%s774] ss:$8 sm:$0xf]
  %v777 = vlaneseq
  %v778 = vshrl.u32 %v777, 7
  %v779 = vsub.s32 0, %v778
  %v780 = vrot.slane %v775, %v779
  %v781 = vlaneseq
  %v782 = vshrl.u32 %v781, 7
  %v783 = vsub.s32 1, %v782
  %v784 = vrot.slane %v775, %v783
  %v785 = vlaneseq
  %v786 = vshrl.u32 %v785, 7
  %v787 = vsub.s32 2, %v786
  %v788 = vrot.slane %v775, %v787
  %v789 = vlaneseq
  %v790 = vshrl.u32 %v789, 7
  %v791 = vsub.s32 3, %v790
  %v792 = vrot.slane %v775, %v791
  %v797 = vmul.f32 %v770, %v780
  %v798 = vmul.f32 %v766, %v784
  %v799 = vmul.f32 %v762, %v788
  %v800 = vmul.f32 %v758, %v792
  %v801 = vmul.f32 %v771, %v780
  %v802 = vmul.f32 %v767, %v784
  %v803 = vmul.f32 %v763, %v788
  %v804 = vmul.f32 %v759, %v792
  %v805 = vmul.f32 %v772, %v780
  %v806 = vmul.f32 %v768, %v784
  %v807 = vmul.f32 %v764, %v788
  %v808 = vmul.f32 %v760, %v792
  %v809 = vmul.f32 %v773, %v780
  %v810 = vmul.f32 %v769, %v784
  %v811 = vmul.f32 %v765, %v788
  %v812 = vmul.f32 %v761, %v792
  %s813 = scalar_lea.vmem %s1, 7
  %v814 = vld [vmem:[%s813] ss:$8 sm:$0xf]
  %v816 = vlaneseq
  %v817 = vshrl.u32 %v816, 7
  %v818 = vsub.s32 0, %v817
  %v819 = vrot.slane %v814, %v818
  %v820 = vlaneseq
  %v821 = vshrl.u32 %v820, 7
  %v822 = vsub.s32 1, %v821
  %v823 = vrot.slane %v814, %v822
  %v824 = vlaneseq
  %v825 = vshrl.u32 %v824, 7
  %v826 = vsub.s32 2, %v825
  %v827 = vrot.slane %v814, %v826
  %v828 = vlaneseq
  %v829 = vshrl.u32 %v828, 7
  %v830 = vsub.s32 3, %v829
  %v831 = vrot.slane %v814, %v830
  %v836 = vmul.f32 %v201, %v819
  %v837 = vmul.f32 %v202, %v823
  %v838 = vmul.f32 %v203, %v827
  %v839 = vmul.f32 %v204, %v831
  %v840 = vmul.f32 %v205, %v819
  %v841 = vmul.f32 %v206, %v823
  %v842 = vmul.f32 %v207, %v827
  %v843 = vmul.f32 %v208, %v831
  %v844 = vmul.f32 %v209, %v819
  %v845 = vmul.f32 %v210, %v823
  %v846 = vmul.f32 %v211, %v827
  %v847 = vmul.f32 %v212, %v831
  %v848 = vmul.f32 %v213, %v819
  %v849 = vmul.f32 %v214, %v823
  %v850 = vmul.f32 %v215, %v827
  %v851 = vmul.f32 %v216, %v831
  %v852 = vadd.f32 %v797, %v836
  %v853 = vadd.f32 %v798, %v837
  %v854 = vadd.f32 %v799, %v838
  %v855 = vadd.f32 %v800, %v839
  %v856 = vadd.f32 %v801, %v840
  %v857 = vadd.f32 %v802, %v841
  %v858 = vadd.f32 %v803, %v842
  %v859 = vadd.f32 %v804, %v843
  %v860 = vadd.f32 %v805, %v844
  %v861 = vadd.f32 %v806, %v845
  %v862 = vadd.f32 %v807, %v846
  %v863 = vadd.f32 %v808, %v847
  %v864 = vadd.f32 %v809, %v848
  %v865 = vadd.f32 %v810, %v849
  %v866 = vadd.f32 %v811, %v850
  %v867 = vadd.f32 %v812, %v851
  %868 = vrot.lane.b32.xlu0 %v201, 96
  %v869 = vpop.permute.xlu0 %868
  %870 = vrot.lane.b32.xlu0 %v205, 96
  %v871 = vpop.permute.xlu0 %870
  %872 = vrot.lane.b32.xlu0 %v209, 96
  %v873 = vpop.permute.xlu0 %872
  %874 = vrot.lane.b32.xlu0 %v213, 96
  %v875 = vpop.permute.xlu0 %874
  %876 = vrot.lane.b32.xlu0 %v202, 96
  %v877 = vpop.permute.xlu0 %876
  %878 = vrot.lane.b32.xlu0 %v206, 96
  %v879 = vpop.permute.xlu0 %878
  %880 = vrot.lane.b32.xlu0 %v210, 96
  %v881 = vpop.permute.xlu0 %880
  %882 = vrot.lane.b32.xlu0 %v214, 96
  %v883 = vpop.permute.xlu0 %882
  %884 = vrot.lane.b32.xlu0 %v203, 96
  %v885 = vpop.permute.xlu0 %884
  %886 = vrot.lane.b32.xlu0 %v207, 96
  %v887 = vpop.permute.xlu0 %886
  %888 = vrot.lane.b32.xlu0 %v211, 96
  %v889 = vpop.permute.xlu0 %888
  %890 = vrot.lane.b32.xlu0 %v215, 96
  %v891 = vpop.permute.xlu0 %890
  %892 = vrot.lane.b32.xlu0 %v204, 96
  %v893 = vpop.permute.xlu0 %892
  %894 = vrot.lane.b32.xlu0 %v208, 96
  %v895 = vpop.permute.xlu0 %894
  %896 = vrot.lane.b32.xlu0 %v212, 96
  %v897 = vpop.permute.xlu0 %896
  %898 = vrot.lane.b32.xlu0 %v216, 96
  %v899 = vpop.permute.xlu0 %898
  %v900 = vsel %vm393, %v885, %v893
  %v901 = vsel %vm393, %v887, %v895
  %v902 = vsel %vm393, %v889, %v897
  %v903 = vsel %vm393, %v891, %v899
  %v904 = vsel %vm393, %v877, %v885
  %v905 = vsel %vm393, %v879, %v887
  %v906 = vsel %vm393, %v881, %v889
  %v907 = vsel %vm393, %v883, %v891
  %v908 = vsel %vm393, %v869, %v877
  %v909 = vsel %vm393, %v871, %v879
  %v910 = vsel %vm393, %v873, %v881
  %v911 = vsel %vm393, %v875, %v883
  %v912 = vsel %vm393, %v893, %v869
  %v913 = vsel %vm393, %v895, %v871
  %v914 = vsel %vm393, %v897, %v873
  %v915 = vsel %vm393, %v899, %v875
  %s916 = scalar_lea.vmem %s1, 32
  %v917 = vld [vmem:[%s916] ss:$8 sm:$0xf]
  %v919 = vlaneseq
  %v920 = vshrl.u32 %v919, 7
  %v921 = vsub.s32 0, %v920
  %v922 = vrot.slane %v917, %v921
  %v923 = vlaneseq
  %v924 = vshrl.u32 %v923, 7
  %v925 = vsub.s32 1, %v924
  %v926 = vrot.slane %v917, %v925
  %v927 = vlaneseq
  %v928 = vshrl.u32 %v927, 7
  %v929 = vsub.s32 2, %v928
  %v930 = vrot.slane %v917, %v929
  %v931 = vlaneseq
  %v932 = vshrl.u32 %v931, 7
  %v933 = vsub.s32 3, %v932
  %v934 = vrot.slane %v917, %v933
  %v939 = vmul.f32 %v908, %v922
  %v940 = vmul.f32 %v904, %v926
  %v941 = vmul.f32 %v900, %v930
  %v942 = vmul.f32 %v912, %v934
  %v943 = vmul.f32 %v909, %v922
  %v944 = vmul.f32 %v905, %v926
  %v945 = vmul.f32 %v901, %v930
  %v946 = vmul.f32 %v913, %v934
  %v947 = vmul.f32 %v910, %v922
  %v948 = vmul.f32 %v906, %v926
  %v949 = vmul.f32 %v902, %v930
  %v950 = vmul.f32 %v914, %v934
  %v951 = vmul.f32 %v911, %v922
  %v952 = vmul.f32 %v907, %v926
  %v953 = vmul.f32 %v903, %v930
  %v954 = vmul.f32 %v915, %v934
  %v955 = vadd.f32 %v852, %v939
  %v956 = vadd.f32 %v853, %v940
  %v957 = vadd.f32 %v854, %v941
  %v958 = vadd.f32 %v855, %v942
  %v959 = vadd.f32 %v856, %v943
  %v960 = vadd.f32 %v857, %v944
  %v961 = vadd.f32 %v858, %v945
  %v962 = vadd.f32 %v859, %v946
  %v963 = vadd.f32 %v860, %v947
  %v964 = vadd.f32 %v861, %v948
  %v965 = vadd.f32 %v862, %v949
  %v966 = vadd.f32 %v863, %v950
  %v967 = vadd.f32 %v864, %v951
  %v968 = vadd.f32 %v865, %v952
  %v969 = vadd.f32 %v866, %v953
  %v970 = vadd.f32 %v867, %v954
  %v971 = vadd.f32 %v710, %v955
  %v972 = vadd.f32 %v711, %v956
  %v973 = vadd.f32 %v712, %v957
  %v974 = vadd.f32 %v713, %v958
  %v975 = vadd.f32 %v714, %v959
  %v976 = vadd.f32 %v715, %v960
  %v977 = vadd.f32 %v716, %v961
  %v978 = vadd.f32 %v717, %v962
  %v979 = vadd.f32 %v718, %v963
  %v980 = vadd.f32 %v719, %v964
  %v981 = vadd.f32 %v720, %v965
  %v982 = vadd.f32 %v721, %v966
  %v983 = vadd.f32 %v722, %v967
  %v984 = vadd.f32 %v723, %v968
  %v985 = vadd.f32 %v724, %v969
  %v986 = vadd.f32 %v725, %v970
  %v987 = vld [vmem:[%s2] sm:$0xf]
  %v989 = vlaneseq
  %v990 = vshrl.u32 %v989, 7
  %v991 = vsub.s32 0, %v990
  %v992 = vrot.slane %v987, %v991
  %v993 = vlaneseq
  %v994 = vshrl.u32 %v993, 7
  %v995 = vsub.s32 1, %v994
  %v996 = vrot.slane %v987, %v995
  %v997 = vlaneseq
  %v998 = vshrl.u32 %v997, 7
  %v999 = vsub.s32 2, %v998
  %v1000 = vrot.slane %v987, %v999
  %v1001 = vlaneseq
  %v1002 = vshrl.u32 %v1001, 7
  %v1003 = vsub.s32 3, %v1002
  %v1004 = vrot.slane %v987, %v1003
  %v1009 = vadd.f32 %v971, %v992
  %v1010 = vadd.f32 %v972, %v996
  %v1011 = vadd.f32 %v973, %v1000
  %v1012 = vadd.f32 %v974, %v1004
  %v1013 = vadd.f32 %v975, %v992
  %v1014 = vadd.f32 %v976, %v996
  %v1015 = vadd.f32 %v977, %v1000
  %v1016 = vadd.f32 %v978, %v1004
  %v1017 = vadd.f32 %v979, %v992
  %v1018 = vadd.f32 %v980, %v996
  %v1019 = vadd.f32 %v981, %v1000
  %v1020 = vadd.f32 %v982, %v1004
  %v1021 = vadd.f32 %v983, %v992
  %v1022 = vadd.f32 %v984, %v996
  %v1023 = vadd.f32 %v985, %v1000
  %v1024 = vadd.f32 %v986, %v1004
  %v1025 = vmax.f32 %v1009, 0.0
  %v1026 = vmax.f32 %v1010, 0.0
  %v1027 = vmax.f32 %v1011, 0.0
  %v1028 = vmax.f32 %v1012, 0.0
  %v1029 = vmax.f32 %v1013, 0.0
  %v1030 = vmax.f32 %v1014, 0.0
  %v1031 = vmax.f32 %v1015, 0.0
  %v1032 = vmax.f32 %v1016, 0.0
  %v1033 = vmax.f32 %v1017, 0.0
  %v1034 = vmax.f32 %v1018, 0.0
  %v1035 = vmax.f32 %v1019, 0.0
  %v1036 = vmax.f32 %v1020, 0.0
  %v1037 = vmax.f32 %v1021, 0.0
  %v1038 = vmax.f32 %v1022, 0.0
  %v1039 = vmax.f32 %v1023, 0.0
  %v1040 = vmax.f32 %v1024, 0.0
  %v1041 = vmin.f32 %v1025, 6.0
  %v1042 = vmin.f32 %v1026, 6.0
  %v1043 = vmin.f32 %v1027, 6.0
  %v1044 = vmin.f32 %v1028, 6.0
  %v1045 = vmin.f32 %v1029, 6.0
  %v1046 = vmin.f32 %v1030, 6.0
  %v1047 = vmin.f32 %v1031, 6.0
  %v1048 = vmin.f32 %v1032, 6.0
  %v1049 = vmin.f32 %v1033, 6.0
  %v1050 = vmin.f32 %v1034, 6.0
  %v1051 = vmin.f32 %v1035, 6.0
  %v1052 = vmin.f32 %v1036, 6.0
  %v1053 = vmin.f32 %v1037, 6.0
  %v1054 = vmin.f32 %v1038, 6.0
  %v1055 = vmin.f32 %v1039, 6.0
  %v1056 = vmin.f32 %v1040, 6.0
  %v1057 = vld [vmem:[%s3] sm:$0xff]
  %v1058 = vld [vmem:[%s3 + $0x8] sm:$0xff]
  %v1059 = vld [vmem:[%s3 + $0x10] sm:$0xff]
  %v1060 = vld [vmem:[%s3 + $0x18] sm:$0xff]
  %v1061 = vld [vmem:[%s3 + $0x20] sm:$0xff]
  %v1062 = vld [vmem:[%s3 + $0x28] sm:$0xff]
  %v1063 = vld [vmem:[%s3 + $0x30] sm:$0xff]
  %v1064 = vld [vmem:[%s3 + $0x38] sm:$0xff]
  %v1065 = vld [vmem:[%s3 + $0x40] sm:$0xff]
  %v1066 = vld [vmem:[%s3 + $0x48] sm:$0xff]
  %v1067 = vld [vmem:[%s3 + $0x50] sm:$0xff]
  %v1068 = vld [vmem:[%s3 + $0x58] sm:$0xff]
  %v1069 = vld [vmem:[%s3 + $0x60] sm:$0xff]
  %v1070 = vld [vmem:[%s3 + $0x68] sm:$0xff]
  %v1071 = vld [vmem:[%s3 + $0x70] sm:$0xff]
  %v1072 = vld [vmem:[%s3 + $0x78] sm:$0xff]
  %1073 = vmatprep.subr.mxu0 0.0
  %1074 = vmatpush1.msra.mxu0 %v1057
  %1075 = vmatprep.subr.mxu0 0.0
  %1076 = vmatpush1.msra.mxu0 %v1058
  %1077 = vmatprep.subr.mxu0 0.0
  %1078 = vmatpush1.msra.mxu0 %v1059
  %1079 = vmatprep.subr.mxu0 0.0
  %1080 = vmatpush1.msra.mxu0 %v1060
  %1081 = vmatprep.subr.mxu0 0.0
  %1082 = vmatpush1.msra.mxu0 %v1061
  %1083 = vmatprep.subr.mxu0 0.0
  %1084 = vmatpush1.msra.mxu0 %v1062
  %1085 = vmatprep.subr.mxu0 0.0
  %1086 = vmatpush1.msra.mxu0 %v1063
  %1087 = vmatprep.subr.mxu0 0.0
  %1088 = vmatpush1.msra.mxu0 %v1064
  %1089 = vmatprep.subr.mxu0 0.0
  %1090 = vmatpush1.msra.mxu0 %v1065
  %1091 = vmatprep.subr.mxu0 0.0
  %1092 = vmatpush1.msra.mxu0 %v1066
  %1093 = vmatprep.subr.mxu0 0.0
  %1094 = vmatpush1.msra.mxu0 %v1067
  %1095 = vmatprep.subr.mxu0 0.0
  %1096 = vmatpush1.msra.mxu0 %v1068
  %1097 = vmatprep.subr.mxu0 0.0
  %1098 = vmatpush1.msra.mxu0 %v1069
  %1099 = vmatprep.subr.mxu0 0.0
  %1100 = vmatpush1.msra.mxu0 %v1070
  %1101 = vmatprep.subr.mxu0 0.0
  %1102 = vmatpush1.msra.mxu0 %v1071
  %1103 = vmatprep.subr.mxu0 0.0
  %1104 = vmatpush1.msra.mxu0 %v1072
  %1105 = vmatprep.subr.mxu0 0.0
  %1106 = vmatpush1.msra.mxu0 0.0
  %1107 = vmatprep.subr.mxu0 0.0
  %1108 = vmatpush1.msra.mxu0 0.0
  %1109 = vmatprep.subr.mxu0 0.0
  %1110 = vmatpush1.msra.mxu0 0.0
  %1111 = vmatprep.subr.mxu0 0.0
  %1112 = vmatpush1.msra.mxu0 0.0
  %1113 = vmatprep.subr.mxu0 0.0
  %1114 = vmatpush1.msra.mxu0 0.0
  %1115 = vmatprep.subr.mxu0 0.0
  %1116 = vmatpush1.msra.mxu0 0.0
  %1117 = vmatprep.subr.mxu0 0.0
  %1118 = vmatpush1.msra.mxu0 0.0
  %1119 = vmatprep.subr.mxu0 0.0
  %1120 = vmatpush1.msra.mxu0 0.0
  %1121 = vmatprep.subr.mxu0 0.0
  %1122 = vmatpush1.msra.mxu0 0.0
  %1123 = vmatprep.subr.mxu0 0.0
  %1124 = vmatpush1.msra.mxu0 0.0
  %1125 = vmatprep.subr.mxu0 0.0
  %1126 = vmatpush1.msra.mxu0 0.0
  %1127 = vmatprep.subr.mxu0 0.0
  %1128 = vmatpush1.msra.mxu0 0.0
  %1129 = vmatprep.subr.mxu0 0.0
  %1130 = vmatpush1.msra.mxu0 0.0
  %1131 = vmatprep.subr.mxu0 0.0
  %1132 = vmatpush1.msra.mxu0 0.0
  %1133 = vmatprep.subr.mxu0 0.0
  %1134 = vmatpush1.msra.mxu0 0.0
  %1135 = vmatprep.subr.mxu0 0.0
  %1136 = vmatpush1.msra.mxu0 0.0
  %1137 = vmatprep.mubr.f32.mxu0 0.0
  %1138 = vmatmul.mubr.f32.gmra.mrb[0].mxu0 %v1041
  %v1139 = vpop.f32.mrb[0].mxu0
  %v1140 = vadd.f32 0.0, %v1139
  %v1141 = vpop.f32.mrb[0].mxu0
  %1142 = vmatprep.mubr.f32.mxu0 0.0
  %1143 = vmatmul.mubr.f32.gmra.mrb[0].mxu0 %v1045
  %v1144 = vpop.f32.mrb[0].mxu0
  %v1145 = vadd.f32 0.0, %v1144
  %v1146 = vpop.f32.mrb[0].mxu0
  %1147 = vmatprep.mubr.f32.mxu0 0.0
  %1148 = vmatmul.mubr.f32.gmra.mrb[0].mxu0 %v1049
  %v1149 = vpop.f32.mrb[0].mxu0
  %v1150 = vadd.f32 0.0, %v1149
  %v1151 = vpop.f32.mrb[0].mxu0
  %1152 = vmatprep.mubr.f32.mxu0 0.0
  %1153 = vmatmul.mubr.f32.gmra.mrb[0].mxu0 %v1053
  %v1154 = vpop.f32.mrb[0].mxu0
  %v1155 = vadd.f32 0.0, %v1154
  %v1156 = vpop.f32.mrb[0].mxu0
  %1157 = vdwg.mxu0
  %1158 = vmatprep.subr.mxu0 0.0
  %1159 = vmatpush1.msra.mxu0 %v1057
  %1160 = vmatprep.subr.mxu0 0.0
  %1161 = vmatpush1.msra.mxu0 %v1058
  %1162 = vmatprep.subr.mxu0 0.0
  %1163 = vmatpush1.msra.mxu0 %v1059
  %1164 = vmatprep.subr.mxu0 0.0
  %1165 = vmatpush1.msra.mxu0 %v1060
  %1166 = vmatprep.subr.mxu0 0.0
  %1167 = vmatpush1.msra.mxu0 %v1061
  %1168 = vmatprep.subr.mxu0 0.0
  %1169 = vmatpush1.msra.mxu0 %v1062
  %1170 = vmatprep.subr.mxu0 0.0
  %1171 = vmatpush1.msra.mxu0 %v1063
  %1172 = vmatprep.subr.mxu0 0.0
  %1173 = vmatpush1.msra.mxu0 %v1064
  %1174 = vmatprep.subr.mxu0 0.0
  %1175 = vmatpush1.msra.mxu0 %v1065
  %1176 = vmatprep.subr.mxu0 0.0
  %1177 = vmatpush1.msra.mxu0 %v1066
  %1178 = vmatprep.subr.mxu0 0.0
  %1179 = vmatpush1.msra.mxu0 %v1067
  %1180 = vmatprep.subr.mxu0 0.0
  %1181 = vmatpush1.msra.mxu0 %v1068
  %1182 = vmatprep.subr.mxu0 0.0
  %1183 = vmatpush1.msra.mxu0 %v1069
  %1184 = vmatprep.subr.mxu0 0.0
  %1185 = vmatpush1.msra.mxu0 %v1070
  %1186 = vmatprep.subr.mxu0 0.0
  %1187 = vmatpush1.msra.mxu0 %v1071
  %1188 = vmatprep.subr.mxu0 0.0
  %1189 = vmatpush1.msra.mxu0 %v1072
  %1190 = vmatprep.subr.mxu0 0.0
  %1191 = vmatpush1.msra.mxu0 0.0
  %1192 = vmatprep.subr.mxu0 0.0
  %1193 = vmatpush1.msra.mxu0 0.0
  %1194 = vmatprep.subr.mxu0 0.0
  %1195 = vmatpush1.msra.mxu0 0.0
  %1196 = vmatprep.subr.mxu0 0.0
  %1197 = vmatpush1.msra.mxu0 0.0
  %1198 = vmatprep.subr.mxu0 0.0
  %1199 = vmatpush1.msra.mxu0 0.0
  %1200 = vmatprep.subr.mxu0 0.0
  %1201 = vmatpush1.msra.mxu0 0.0
  %1202 = vmatprep.subr.mxu0 0.0
  %1203 = vmatpush1.msra.mxu0 0.0
  %1204 = vmatprep.subr.mxu0 0.0
  %1205 = vmatpush1.msra.mxu0 0.0
  %1206 = vmatprep.subr.mxu0 0.0
  %1207 = vmatpush1.msra.mxu0 0.0
  %1208 = vmatprep.subr.mxu0 0.0
  %1209 = vmatpush1.msra.mxu0 0.0
  %1210 = vmatprep.subr.mxu0 0.0
  %1211 = vmatpush1.msra.mxu0 0.0
  %1212 = vmatprep.subr.mxu0 0.0
  %1213 = vmatpush1.msra.mxu0 0.0
  %1214 = vmatprep.subr.mxu0 0.0
  %1215 = vmatpush1.msra.mxu0 0.0
  %1216 = vmatprep.subr.mxu0 0.0
  %1217 = vmatpush1.msra.mxu0 0.0
  %1218 = vmatprep.subr.mxu0 0.0
  %1219 = vmatpush1.msra.mxu0 0.0
  %1220 = vmatprep.subr.mxu0 0.0
  %1221 = vmatpush1.msra.mxu0 0.0
  %1222 = vmatprep.mubr.f32.mxu0 0.0
  %1223 = vmatmul.mubr.f32.gmra.mrb[0].mxu0 %v1042
  %v1224 = vpop.f32.mrb[0].mxu0
  %v1225 = vadd.f32 0.0, %v1224
  %v1226 = vpop.f32.mrb[0].mxu0
  %1227 = vmatprep.mubr.f32.mxu0 0.0
  %1228 = vmatmul.mubr.f32.gmra.mrb[0].mxu0 %v1046
  %v1229 = vpop.f32.mrb[0].mxu0
  %v1230 = vadd.f32 0.0, %v1229
  %v1231 = vpop.f32.mrb[0].mxu0
  %1232 = vmatprep.mubr.f32.mxu0 0.0
  %1233 = vmatmul.mubr.f32.gmra.mrb[0].mxu0 %v1050
  %v1234 = vpop.f32.mrb[0].mxu0
  %v1235 = vadd.f32 0.0, %v1234
  %v1236 = vpop.f32.mrb[0].mxu0
  %1237 = vmatprep.mubr.f32.mxu0 0.0
  %1238 = vmatmul.mubr.f32.gmra.mrb[0].mxu0 %v1054
  %v1239 = vpop.f32.mrb[0].mxu0
  %v1240 = vadd.f32 0.0, %v1239
  %v1241 = vpop.f32.mrb[0].mxu0
  %1242 = vdwg.mxu0
  %1243 = vmatprep.subr.mxu0 0.0
  %1244 = vmatpush1.msra.mxu0 %v1057
  %1245 = vmatprep.subr.mxu0 0.0
  %1246 = vmatpush1.msra.mxu0 %v1058
  %1247 = vmatprep.subr.mxu0 0.0
  %1248 = vmatpush1.msra.mxu0 %v1059
  %1249 = vmatprep.subr.mxu0 0.0
  %1250 = vmatpush1.msra.mxu0 %v1060
  %1251 = vmatprep.subr.mxu0 0.0
  %1252 = vmatpush1.msra.mxu0 %v1061
  %1253 = vmatprep.subr.mxu0 0.0
  %1254 = vmatpush1.msra.mxu0 %v1062
  %1255 = vmatprep.subr.mxu0 0.0
  %1256 = vmatpush1.msra.mxu0 %v1063
  %1257 = vmatprep.subr.mxu0 0.0
  %1258 = vmatpush1.msra.mxu0 %v1064
  %1259 = vmatprep.subr.mxu0 0.0
  %1260 = vmatpush1.msra.mxu0 %v1065
  %1261 = vmatprep.subr.mxu0 0.0
  %1262 = vmatpush1.msra.mxu0 %v1066
  %1263 = vmatprep.subr.mxu0 0.0
  %1264 = vmatpush1.msra.mxu0 %v1067
  %1265 = vmatprep.subr.mxu0 0.0
  %1266 = vmatpush1.msra.mxu0 %v1068
  %1267 = vmatprep.subr.mxu0 0.0
  %1268 = vmatpush1.msra.mxu0 %v1069
  %1269 = vmatprep.subr.mxu0 0.0
  %1270 = vmatpush1.msra.mxu0 %v1070
  %1271 = vmatprep.subr.mxu0 0.0
  %1272 = vmatpush1.msra.mxu0 %v1071
  %1273 = vmatprep.subr.mxu0 0.0
  %1274 = vmatpush1.msra.mxu0 %v1072
  %1275 = vmatprep.subr.mxu0 0.0
  %1276 = vmatpush1.msra.mxu0 0.0
  %1277 = vmatprep.subr.mxu0 0.0
  %1278 = vmatpush1.msra.mxu0 0.0
  %1279 = vmatprep.subr.mxu0 0.0
  %1280 = vmatpush1.msra.mxu0 0.0
  %1281 = vmatprep.subr.mxu0 0.0
  %1282 = vmatpush1.msra.mxu0 0.0
  %1283 = vmatprep.subr.mxu0 0.0
  %1284 = vmatpush1.msra.mxu0 0.0
  %1285 = vmatprep.subr.mxu0 0.0
  %1286 = vmatpush1.msra.mxu0 0.0
  %1287 = vmatprep.subr.mxu0 0.0
  %1288 = vmatpush1.msra.mxu0 0.0
  %1289 = vmatprep.subr.mxu0 0.0
  %1290 = vmatpush1.msra.mxu0 0.0
  %1291 = vmatprep.subr.mxu0 0.0
  %1292 = vmatpush1.msra.mxu0 0.0
  %1293 = vmatprep.subr.mxu0 0.0
  %1294 = vmatpush1.msra.mxu0 0.0
  %1295 = vmatprep.subr.mxu0 0.0
  %1296 = vmatpush1.msra.mxu0 0.0
  %1297 = vmatprep.subr.mxu0 0.0
  %1298 = vmatpush1.msra.mxu0 0.0
  %1299 = vmatprep.subr.mxu0 0.0
  %1300 = vmatpush1.msra.mxu0 0.0
  %1301 = vmatprep.subr.mxu0 0.0
  %1302 = vmatpush1.msra.mxu0 0.0
  %1303 = vmatprep.subr.mxu0 0.0
  %1304 = vmatpush1.msra.mxu0 0.0
  %1305 = vmatprep.subr.mxu0 0.0
  %1306 = vmatpush1.msra.mxu0 0.0
  %1307 = vmatprep.mubr.f32.mxu0 0.0
  %1308 = vmatmul.mubr.f32.gmra.mrb[0].mxu0 %v1043
  %v1309 = vpop.f32.mrb[0].mxu0
  %v1310 = vadd.f32 0.0, %v1309
  %v1311 = vpop.f32.mrb[0].mxu0
  %1312 = vmatprep.mubr.f32.mxu0 0.0
  %1313 = vmatmul.mubr.f32.gmra.mrb[0].mxu0 %v1047
  %v1314 = vpop.f32.mrb[0].mxu0
  %v1315 = vadd.f32 0.0, %v1314
  %v1316 = vpop.f32.mrb[0].mxu0
  %1317 = vmatprep.mubr.f32.mxu0 0.0
  %1318 = vmatmul.mubr.f32.gmra.mrb[0].mxu0 %v1051
  %v1319 = vpop.f32.mrb[0].mxu0
  %v1320 = vadd.f32 0.0, %v1319
  %v1321 = vpop.f32.mrb[0].mxu0
  %1322 = vmatprep.mubr.f32.mxu0 0.0
  %1323 = vmatmul.mubr.f32.gmra.mrb[0].mxu0 %v1055
  %v1324 = vpop.f32.mrb[0].mxu0
  %v1325 = vadd.f32 0.0, %v1324
  %v1326 = vpop.f32.mrb[0].mxu0
  %1327 = vdwg.mxu0
  %1328 = vmatprep.subr.mxu0 0.0
  %1329 = vmatpush1.msra.mxu0 %v1057
  %1330 = vmatprep.subr.mxu0 0.0
  %1331 = vmatpush1.msra.mxu0 %v1058
  %1332 = vmatprep.subr.mxu0 0.0
  %1333 = vmatpush1.msra.mxu0 %v1059
  %1334 = vmatprep.subr.mxu0 0.0
  %1335 = vmatpush1.msra.mxu0 %v1060
  %1336 = vmatprep.subr.mxu0 0.0
  %1337 = vmatpush1.msra.mxu0 %v1061
  %1338 = vmatprep.subr.mxu0 0.0
  %1339 = vmatpush1.msra.mxu0 %v1062
  %1340 = vmatprep.subr.mxu0 0.0
  %1341 = vmatpush1.msra.mxu0 %v1063
  %1342 = vmatprep.subr.mxu0 0.0
  %1343 = vmatpush1.msra.mxu0 %v1064
  %1344 = vmatprep.subr.mxu0 0.0
  %1345 = vmatpush1.msra.mxu0 %v1065
  %1346 = vmatprep.subr.mxu0 0.0
  %1347 = vmatpush1.msra.mxu0 %v1066
  %1348 = vmatprep.subr.mxu0 0.0
  %1349 = vmatpush1.msra.mxu0 %v1067
  %1350 = vmatprep.subr.mxu0 0.0
  %1351 = vmatpush1.msra.mxu0 %v1068
  %1352 = vmatprep.subr.mxu0 0.0
  %1353 = vmatpush1.msra.mxu0 %v1069
  %1354 = vmatprep.subr.mxu0 0.0
  %1355 = vmatpush1.msra.mxu0 %v1070
  %1356 = vmatprep.subr.mxu0 0.0
  %1357 = vmatpush1.msra.mxu0 %v1071
  %1358 = vmatprep.subr.mxu0 0.0
  %1359 = vmatpush1.msra.mxu0 %v1072
  %1360 = vmatprep.subr.mxu0 0.0
  %1361 = vmatpush1.msra.mxu0 0.0
  %1362 = vmatprep.subr.mxu0 0.0
  %1363 = vmatpush1.msra.mxu0 0.0
  %1364 = vmatprep.subr.mxu0 0.0
  %1365 = vmatpush1.msra.mxu0 0.0
  %1366 = vmatprep.subr.mxu0 0.0
  %1367 = vmatpush1.msra.mxu0 0.0
  %1368 = vmatprep.subr.mxu0 0.0
  %1369 = vmatpush1.msra.mxu0 0.0
  %1370 = vmatprep.subr.mxu0 0.0
  %1371 = vmatpush1.msra.mxu0 0.0
  %1372 = vmatprep.subr.mxu0 0.0
  %1373 = vmatpush1.msra.mxu0 0.0
  %1374 = vmatprep.subr.mxu0 0.0
  %1375 = vmatpush1.msra.mxu0 0.0
  %1376 = vmatprep.subr.mxu0 0.0
  %1377 = vmatpush1.msra.mxu0 0.0
  %1378 = vmatprep.subr.mxu0 0.0
  %1379 = vmatpush1.msra.mxu0 0.0
  %1380 = vmatprep.subr.mxu0 0.0
  %1381 = vmatpush1.msra.mxu0 0.0
  %1382 = vmatprep.subr.mxu0 0.0
  %1383 = vmatpush1.msra.mxu0 0.0
  %1384 = vmatprep.subr.mxu0 0.0
  %1385 = vmatpush1.msra.mxu0 0.0
  %1386 = vmatprep.subr.mxu0 0.0
  %1387 = vmatpush1.msra.mxu0 0.0
  %1388 = vmatprep.subr.mxu0 0.0
  %1389 = vmatpush1.msra.mxu0 0.0
  %1390 = vmatprep.subr.mxu0 0.0
  %1391 = vmatpush1.msra.mxu0 0.0
  %1392 = vmatprep.mubr.f32.mxu0 0.0
  %1393 = vmatmul.mubr.f32.gmra.mrb[0].mxu0 %v1044
  %v1394 = vpop.f32.mrb[0].mxu0
  %v1395 = vadd.f32 0.0, %v1394
  %v1396 = vpop.f32.mrb[0].mxu0
  %1397 = vmatprep.mubr.f32.mxu0 0.0
  %1398 = vmatmul.mubr.f32.gmra.mrb[0].mxu0 %v1048
  %v1399 = vpop.f32.mrb[0].mxu0
  %v1400 = vadd.f32 0.0, %v1399
  %v1401 = vpop.f32.mrb[0].mxu0
  %1402 = vmatprep.mubr.f32.mxu0 0.0
  %1403 = vmatmul.mubr.f32.gmra.mrb[0].mxu0 %v1052
  %v1404 = vpop.f32.mrb[0].mxu0
  %v1405 = vadd.f32 0.0, %v1404
  %v1406 = vpop.f32.mrb[0].mxu0
  %1407 = vmatprep.mubr.f32.mxu0 0.0
  %1408 = vmatmul.mubr.f32.gmra.mrb[0].mxu0 %v1056
  %v1409 = vpop.f32.mrb[0].mxu0
  %v1410 = vadd.f32 0.0, %v1409
  %v1411 = vpop.f32.mrb[0].mxu0
  %1412 = vdwg.mxu0
  %v1413 = vld [vmem:[%s4] sm:$0xf]
  %v1415 = vlaneseq
  %v1416 = vshrl.u32 %v1415, 7
  %v1417 = vsub.s32 0, %v1416
  %v1418 = vrot.slane %v1413, %v1417
  %v1419 = vlaneseq
  %v1420 = vshrl.u32 %v1419, 7
  %v1421 = vsub.s32 1, %v1420
  %v1422 = vrot.slane %v1413, %v1421
  %v1423 = vlaneseq
  %v1424 = vshrl.u32 %v1423, 7
  %v1425 = vsub.s32 2, %v1424
  %v1426 = vrot.slane %v1413, %v1425
  %v1427 = vlaneseq
  %v1428 = vshrl.u32 %v1427, 7
  %v1429 = vsub.s32 3, %v1428
  %v1430 = vrot.slane %v1413, %v1429
  %v1435 = vadd.f32 %v1140, %v1418
  %v1436 = vadd.f32 %v1225, %v1422
  %v1437 = vadd.f32 %v1310, %v1426
  %v1438 = vadd.f32 %v1395, %v1430
  %v1439 = vadd.f32 %v1145, %v1418
  %v1440 = vadd.f32 %v1230, %v1422
  %v1441 = vadd.f32 %v1315, %v1426
  %v1442 = vadd.f32 %v1400, %v1430
  %v1443 = vadd.f32 %v1150, %v1418
  %v1444 = vadd.f32 %v1235, %v1422
  %v1445 = vadd.f32 %v1320, %v1426
  %v1446 = vadd.f32 %v1405, %v1430
  %v1447 = vadd.f32 %v1155, %v1418
  %v1448 = vadd.f32 %v1240, %v1422
  %v1449 = vadd.f32 %v1325, %v1426
  %v1450 = vadd.f32 %v1410, %v1430
  %v1451 = vmax.f32 %v1435, 0.0
  %v1452 = vmax.f32 %v1436, 0.0
  %v1453 = vmax.f32 %v1437, 0.0
  %v1454 = vmax.f32 %v1438, 0.0
  %v1455 = vmax.f32 %v1439, 0.0
  %v1456 = vmax.f32 %v1440, 0.0
  %v1457 = vmax.f32 %v1441, 0.0
  %v1458 = vmax.f32 %v1442, 0.0
  %v1459 = vmax.f32 %v1443, 0.0
  %v1460 = vmax.f32 %v1444, 0.0
  %v1461 = vmax.f32 %v1445, 0.0
  %v1462 = vmax.f32 %v1446, 0.0
  %v1463 = vmax.f32 %v1447, 0.0
  %v1464 = vmax.f32 %v1448, 0.0
  %v1465 = vmax.f32 %v1449, 0.0
  %v1466 = vmax.f32 %v1450, 0.0
  %v1467 = vmin.f32 %v1451, 6.0
  %v1468 = vmin.f32 %v1452, 6.0
  %v1469 = vmin.f32 %v1453, 6.0
  %v1470 = vmin.f32 %v1454, 6.0
  %v1471 = vmin.f32 %v1455, 6.0
  %v1472 = vmin.f32 %v1456, 6.0
  %v1473 = vmin.f32 %v1457, 6.0
  %v1474 = vmin.f32 %v1458, 6.0
  %v1475 = vmin.f32 %v1459, 6.0
  %v1476 = vmin.f32 %v1460, 6.0
  %v1477 = vmin.f32 %v1461, 6.0
  %v1478 = vmin.f32 %v1462, 6.0
  %v1479 = vmin.f32 %v1463, 6.0
  %v1480 = vmin.f32 %v1464, 6.0
  %v1481 = vmin.f32 %v1465, 6.0
  %v1482 = vmin.f32 %v1466, 6.0
  %v1483 = vrot.slane %v1467, 7
  %v1484 = vrot.slane %v1468, 7
  %v1485 = vrot.slane %v1469, 7
  %v1486 = vrot.slane %v1470, 7
  %v1487 = vrot.slane %v1471, 7
  %v1488 = vrot.slane %v1472, 7
  %v1489 = vrot.slane %v1473, 7
  %v1490 = vrot.slane %v1474, 7
  %v1491 = vrot.slane %v1475, 7
  %v1492 = vrot.slane %v1476, 7
  %v1493 = vrot.slane %v1477, 7
  %v1494 = vrot.slane %v1478, 7
  %v1495 = vrot.slane %v1479, 7
  %v1496 = vrot.slane %v1480, 7
  %v1497 = vrot.slane %v1481, 7
  %v1498 = vrot.slane %v1482, 7
  %v1499 = vsel %vm119, %v1491, %v1495
  %v1500 = vsel %vm119, %v1492, %v1496
  %v1501 = vsel %vm119, %v1493, %v1497
  %v1502 = vsel %vm119, %v1494, %v1498
  %v1503 = vsel %vm119, %v1487, %v1491
  %v1504 = vsel %vm119, %v1488, %v1492
  %v1505 = vsel %vm119, %v1489, %v1493
  %v1506 = vsel %vm119, %v1490, %v1494
  %v1507 = vsel %vm119, %v1483, %v1487
  %v1508 = vsel %vm119, %v1484, %v1488
  %v1509 = vsel %vm119, %v1485, %v1489
  %v1510 = vsel %vm119, %v1486, %v1490
  %v1511 = vsel %vm119, %v1495, %v1483
  %v1512 = vsel %vm119, %v1496, %v1484
  %v1513 = vsel %vm119, %v1497, %v1485
  %v1514 = vsel %vm119, %v1498, %v1486
  %v1515 = vsel %vm140, %v1511, 0.0
  %v1516 = vsel %vm140, %v1512, 0.0
  %v1517 = vsel %vm140, %v1513, 0.0
  %v1518 = vsel %vm140, %v1514, 0.0
  %v1519 = vsel %vm141, %v1507, 0.0
  %v1520 = vsel %vm141, %v1508, 0.0
  %v1521 = vsel %vm141, %v1509, 0.0
  %v1522 = vsel %vm141, %v1510, 0.0
  %v1523 = vsel %vm142, %v1503, 0.0
  %v1524 = vsel %vm142, %v1504, 0.0
  %v1525 = vsel %vm142, %v1505, 0.0
  %v1526 = vsel %vm142, %v1506, 0.0
  %v1527 = vsel %vm143, %v1499, 0.0
  %v1528 = vsel %vm143, %v1500, 0.0
  %v1529 = vsel %vm143, %v1501, 0.0
  %v1530 = vsel %vm143, %v1502, 0.0
  %v1531 = vrot.slane %v1467, 1
  %v1532 = vrot.slane %v1468, 1
  %v1533 = vrot.slane %v1469, 1
  %v1534 = vrot.slane %v1470, 1
  %v1535 = vrot.slane %v1471, 1
  %v1536 = vrot.slane %v1472, 1
  %v1537 = vrot.slane %v1473, 1
  %v1538 = vrot.slane %v1474, 1
  %v1539 = vrot.slane %v1475, 1
  %v1540 = vrot.slane %v1476, 1
  %v1541 = vrot.slane %v1477, 1
  %v1542 = vrot.slane %v1478, 1
  %v1543 = vrot.slane %v1479, 1
  %v1544 = vrot.slane %v1480, 1
  %v1545 = vrot.slane %v1481, 1
  %v1546 = vrot.slane %v1482, 1
  %v1547 = vsel %vm176, %v1539, %v1543
  %v1548 = vsel %vm176, %v1540, %v1544
  %v1549 = vsel %vm176, %v1541, %v1545
  %v1550 = vsel %vm176, %v1542, %v1546
  %v1551 = vsel %vm176, %v1535, %v1539
  %v1552 = vsel %vm176, %v1536, %v1540
  %v1553 = vsel %vm176, %v1537, %v1541
  %v1554 = vsel %vm176, %v1538, %v1542
  %v1555 = vsel %vm176, %v1531, %v1535
  %v1556 = vsel %vm176, %v1532, %v1536
  %v1557 = vsel %vm176, %v1533, %v1537
  %v1558 = vsel %vm176, %v1534, %v1538
  %v1559 = vsel %vm176, %v1543, %v1531
  %v1560 = vsel %vm176, %v1544, %v1532
  %v1561 = vsel %vm176, %v1545, %v1533
  %v1562 = vsel %vm176, %v1546, %v1534
  %v1563 = vsel %vm197, %v1555, 0.0
  %v1564 = vsel %vm197, %v1556, 0.0
  %v1565 = vsel %vm197, %v1557, 0.0
  %v1566 = vsel %vm197, %v1558, 0.0
  %v1567 = vsel %vm198, %v1551, 0.0
  %v1568 = vsel %vm198, %v1552, 0.0
  %v1569 = vsel %vm198, %v1553, 0.0
  %v1570 = vsel %vm198, %v1554, 0.0
  %v1571 = vsel %vm199, %v1547, 0.0
  %v1572 = vsel %vm199, %v1548, 0.0
  %v1573 = vsel %vm199, %v1549, 0.0
  %v1574 = vsel %vm199, %v1550, 0.0
  %v1575 = vsel %vm200, %v1559, 0.0
  %v1576 = vsel %vm200, %v1560, 0.0
  %v1577 = vsel %vm200, %v1561, 0.0
  %v1578 = vsel %vm200, %v1562, 0.0
  %1579 = vrot.lane.b32.xlu0 %v1515, 32
  %v1580 = vpop.permute.xlu0 %1579
  %1581 = vrot.lane.b32.xlu0 %v1519, 32
  %v1582 = vpop.permute.xlu0 %1581
  %1583 = vrot.lane.b32.xlu0 %v1523, 32
  %v1584 = vpop.permute.xlu0 %1583
  %1585 = vrot.lane.b32.xlu0 %v1527, 32
  %v1586 = vpop.permute.xlu0 %1585
  %1587 = vrot.lane.b32.xlu0 %v1516, 32
  %v1588 = vpop.permute.xlu0 %1587
  %1589 = vrot.lane.b32.xlu0 %v1520, 32
  %v1590 = vpop.permute.xlu0 %1589
  %1591 = vrot.lane.b32.xlu0 %v1524, 32
  %v1592 = vpop.permute.xlu0 %1591
  %1593 = vrot.lane.b32.xlu0 %v1528, 32
  %v1594 = vpop.permute.xlu0 %1593
  %1595 = vrot.lane.b32.xlu0 %v1517, 32
  %v1596 = vpop.permute.xlu0 %1595
  %1597 = vrot.lane.b32.xlu0 %v1521, 32
  %v1598 = vpop.permute.xlu0 %1597
  %1599 = vrot.lane.b32.xlu0 %v1525, 32
  %v1600 = vpop.permute.xlu0 %1599
  %1601 = vrot.lane.b32.xlu0 %v1529, 32
  %v1602 = vpop.permute.xlu0 %1601
  %1603 = vrot.lane.b32.xlu0 %v1518, 32
  %v1604 = vpop.permute.xlu0 %1603
  %1605 = vrot.lane.b32.xlu0 %v1522, 32
  %v1606 = vpop.permute.xlu0 %1605
  %1607 = vrot.lane.b32.xlu0 %v1526, 32
  %v1608 = vpop.permute.xlu0 %1607
  %1609 = vrot.lane.b32.xlu0 %v1530, 32
  %v1610 = vpop.permute.xlu0 %1609
  %v1611 = vsel %vm251, %v1596, %v1604
  %v1612 = vsel %vm251, %v1598, %v1606
  %v1613 = vsel %vm251, %v1600, %v1608
  %v1614 = vsel %vm251, %v1602, %v1610
  %v1615 = vsel %vm251, %v1588, %v1596
  %v1616 = vsel %vm251, %v1590, %v1598
  %v1617 = vsel %vm251, %v1592, %v1600
  %v1618 = vsel %vm251, %v1594, %v1602
  %v1619 = vsel %vm251, %v1580, %v1588
  %v1620 = vsel %vm251, %v1582, %v1590
  %v1621 = vsel %vm251, %v1584, %v1592
  %v1622 = vsel %vm251, %v1586, %v1594
  %v1623 = vsel %vm251, %v1604, %v1580
  %v1624 = vsel %vm251, %v1606, %v1582
  %v1625 = vsel %vm251, %v1608, %v1584
  %v1626 = vsel %vm251, %v1610, %v1586
  %v1627 = vld [vmem:[%s5] ss:$8 sm:$0xf]
  %v1629 = vlaneseq
  %v1630 = vshrl.u32 %v1629, 7
  %v1631 = vsub.s32 0, %v1630
  %v1632 = vrot.slane %v1627, %v1631
  %v1633 = vlaneseq
  %v1634 = vshrl.u32 %v1633, 7
  %v1635 = vsub.s32 1, %v1634
  %v1636 = vrot.slane %v1627, %v1635
  %v1637 = vlaneseq
  %v1638 = vshrl.u32 %v1637, 7
  %v1639 = vsub.s32 2, %v1638
  %v1640 = vrot.slane %v1627, %v1639
  %v1641 = vlaneseq
  %v1642 = vshrl.u32 %v1641, 7
  %v1643 = vsub.s32 3, %v1642
  %v1644 = vrot.slane %v1627, %v1643
  %v1649 = vmul.f32 %v1623, %v1632
  %v1650 = vmul.f32 %v1619, %v1636
  %v1651 = vmul.f32 %v1615, %v1640
  %v1652 = vmul.f32 %v1611, %v1644
  %v1653 = vmul.f32 %v1624, %v1632
  %v1654 = vmul.f32 %v1620, %v1636
  %v1655 = vmul.f32 %v1616, %v1640
  %v1656 = vmul.f32 %v1612, %v1644
  %v1657 = vmul.f32 %v1625, %v1632
  %v1658 = vmul.f32 %v1621, %v1636
  %v1659 = vmul.f32 %v1617, %v1640
  %v1660 = vmul.f32 %v1613, %v1644
  %v1661 = vmul.f32 %v1626, %v1632
  %v1662 = vmul.f32 %v1622, %v1636
  %v1663 = vmul.f32 %v1618, %v1640
  %v1664 = vmul.f32 %v1614, %v1644
  %s1665 = scalar_lea.vmem %s5, 1
  %v1666 = vld [vmem:[%s1665] ss:$8 sm:$0xf]
  %v1668 = vlaneseq
  %v1669 = vshrl.u32 %v1668, 7
  %v1670 = vsub.s32 0, %v1669
  %v1671 = vrot.slane %v1666, %v1670
  %v1672 = vlaneseq
  %v1673 = vshrl.u32 %v1672, 7
  %v1674 = vsub.s32 1, %v1673
  %v1675 = vrot.slane %v1666, %v1674
  %v1676 = vlaneseq
  %v1677 = vshrl.u32 %v1676, 7
  %v1678 = vsub.s32 2, %v1677
  %v1679 = vrot.slane %v1666, %v1678
  %v1680 = vlaneseq
  %v1681 = vshrl.u32 %v1680, 7
  %v1682 = vsub.s32 3, %v1681
  %v1683 = vrot.slane %v1666, %v1682
  %v1688 = vmul.f32 %v1515, %v1671
  %v1689 = vmul.f32 %v1516, %v1675
  %v1690 = vmul.f32 %v1517, %v1679
  %v1691 = vmul.f32 %v1518, %v1683
  %v1692 = vmul.f32 %v1519, %v1671
  %v1693 = vmul.f32 %v1520, %v1675
  %v1694 = vmul.f32 %v1521, %v1679
  %v1695 = vmul.f32 %v1522, %v1683
  %v1696 = vmul.f32 %v1523, %v1671
  %v1697 = vmul.f32 %v1524, %v1675
  %v1698 = vmul.f32 %v1525, %v1679
  %v1699 = vmul.f32 %v1526, %v1683
  %v1700 = vmul.f32 %v1527, %v1671
  %v1701 = vmul.f32 %v1528, %v1675
  %v1702 = vmul.f32 %v1529, %v1679
  %v1703 = vmul.f32 %v1530, %v1683
  %v1704 = vadd.f32 %v1649, %v1688
  %v1705 = vadd.f32 %v1650, %v1689
  %v1706 = vadd.f32 %v1651, %v1690
  %v1707 = vadd.f32 %v1652, %v1691
  %v1708 = vadd.f32 %v1653, %v1692
  %v1709 = vadd.f32 %v1654, %v1693
  %v1710 = vadd.f32 %v1655, %v1694
  %v1711 = vadd.f32 %v1656, %v1695
  %v1712 = vadd.f32 %v1657, %v1696
  %v1713 = vadd.f32 %v1658, %v1697
  %v1714 = vadd.f32 %v1659, %v1698
  %v1715 = vadd.f32 %v1660, %v1699
  %v1716 = vadd.f32 %v1661, %v1700
  %v1717 = vadd.f32 %v1662, %v1701
  %v1718 = vadd.f32 %v1663, %v1702
  %v1719 = vadd.f32 %v1664, %v1703
  %1720 = vrot.lane.b32.xlu0 %v1515, 96
  %v1721 = vpop.permute.xlu0 %1720
  %1722 = vrot.lane.b32.xlu0 %v1519, 96
  %v1723 = vpop.permute.xlu0 %1722
  %1724 = vrot.lane.b32.xlu0 %v1523, 96
  %v1725 = vpop.permute.xlu0 %1724
  %1726 = vrot.lane.b32.xlu0 %v1527, 96
  %v1727 = vpop.permute.xlu0 %1726
  %1728 = vrot.lane.b32.xlu0 %v1516, 96
  %v1729 = vpop.permute.xlu0 %1728
  %1730 = vrot.lane.b32.xlu0 %v1520, 96
  %v1731 = vpop.permute.xlu0 %1730
  %1732 = vrot.lane.b32.xlu0 %v1524, 96
  %v1733 = vpop.permute.xlu0 %1732
  %1734 = vrot.lane.b32.xlu0 %v1528, 96
  %v1735 = vpop.permute.xlu0 %1734
  %1736 = vrot.lane.b32.xlu0 %v1517, 96
  %v1737 = vpop.permute.xlu0 %1736
  %1738 = vrot.lane.b32.xlu0 %v1521, 96
  %v1739 = vpop.permute.xlu0 %1738
  %1740 = vrot.lane.b32.xlu0 %v1525, 96
  %v1741 = vpop.permute.xlu0 %1740
  %1742 = vrot.lane.b32.xlu0 %v1529, 96
  %v1743 = vpop.permute.xlu0 %1742
  %1744 = vrot.lane.b32.xlu0 %v1518, 96
  %v1745 = vpop.permute.xlu0 %1744
  %1746 = vrot.lane.b32.xlu0 %v1522, 96
  %v1747 = vpop.permute.xlu0 %1746
  %1748 = vrot.lane.b32.xlu0 %v1526, 96
  %v1749 = vpop.permute.xlu0 %1748
  %1750 = vrot.lane.b32.xlu0 %v1530, 96
  %v1751 = vpop.permute.xlu0 %1750
  %v1752 = vsel %vm393, %v1737, %v1745
  %v1753 = vsel %vm393, %v1739, %v1747
  %v1754 = vsel %vm393, %v1741, %v1749
  %v1755 = vsel %vm393, %v1743, %v1751
  %v1756 = vsel %vm393, %v1729, %v1737
  %v1757 = vsel %vm393, %v1731, %v1739
  %v1758 = vsel %vm393, %v1733, %v1741
  %v1759 = vsel %vm393, %v1735, %v1743
  %v1760 = vsel %vm393, %v1721, %v1729
  %v1761 = vsel %vm393, %v1723, %v1731
  %v1762 = vsel %vm393, %v1725, %v1733
  %v1763 = vsel %vm393, %v1727, %v1735
  %v1764 = vsel %vm393, %v1745, %v1721
  %v1765 = vsel %vm393, %v1747, %v1723
  %v1766 = vsel %vm393, %v1749, %v1725
  %v1767 = vsel %vm393, %v1751, %v1727
  %s1768 = scalar_lea.vmem %s5, 2
  %v1769 = vld [vmem:[%s1768] ss:$8 sm:$0xf]
  %v1771 = vlaneseq
  %v1772 = vshrl.u32 %v1771, 7
  %v1773 = vsub.s32 0, %v1772
  %v1774 = vrot.slane %v1769, %v1773
  %v1775 = vlaneseq
  %v1776 = vshrl.u32 %v1775, 7
  %v1777 = vsub.s32 1, %v1776
  %v1778 = vrot.slane %v1769, %v1777
  %v1779 = vlaneseq
  %v1780 = vshrl.u32 %v1779, 7
  %v1781 = vsub.s32 2, %v1780
  %v1782 = vrot.slane %v1769, %v1781
  %v1783 = vlaneseq
  %v1784 = vshrl.u32 %v1783, 7
  %v1785 = vsub.s32 3, %v1784
  %v1786 = vrot.slane %v1769, %v1785
  %v1791 = vmul.f32 %v1760, %v1774
  %v1792 = vmul.f32 %v1756, %v1778
  %v1793 = vmul.f32 %v1752, %v1782
  %v1794 = vmul.f32 %v1764, %v1786
  %v1795 = vmul.f32 %v1761, %v1774
  %v1796 = vmul.f32 %v1757, %v1778
  %v1797 = vmul.f32 %v1753, %v1782
  %v1798 = vmul.f32 %v1765, %v1786
  %v1799 = vmul.f32 %v1762, %v1774
  %v1800 = vmul.f32 %v1758, %v1778
  %v1801 = vmul.f32 %v1754, %v1782
  %v1802 = vmul.f32 %v1766, %v1786
  %v1803 = vmul.f32 %v1763, %v1774
  %v1804 = vmul.f32 %v1759, %v1778
  %v1805 = vmul.f32 %v1755, %v1782
  %v1806 = vmul.f32 %v1767, %v1786
  %v1807 = vadd.f32 %v1704, %v1791
  %v1808 = vadd.f32 %v1705, %v1792
  %v1809 = vadd.f32 %v1706, %v1793
  %v1810 = vadd.f32 %v1707, %v1794
  %v1811 = vadd.f32 %v1708, %v1795
  %v1812 = vadd.f32 %v1709, %v1796
  %v1813 = vadd.f32 %v1710, %v1797
  %v1814 = vadd.f32 %v1711, %v1798
  %v1815 = vadd.f32 %v1712, %v1799
  %v1816 = vadd.f32 %v1713, %v1800
  %v1817 = vadd.f32 %v1714, %v1801
  %v1818 = vadd.f32 %v1715, %v1802
  %v1819 = vadd.f32 %v1716, %v1803
  %v1820 = vadd.f32 %v1717, %v1804
  %v1821 = vadd.f32 %v1718, %v1805
  %v1822 = vadd.f32 %v1719, %v1806
  %1823 = vrot.lane.b32.xlu0 %v1467, 32
  %v1824 = vpop.permute.xlu0 %1823
  %1825 = vrot.lane.b32.xlu0 %v1471, 32
  %v1826 = vpop.permute.xlu0 %1825
  %1827 = vrot.lane.b32.xlu0 %v1475, 32
  %v1828 = vpop.permute.xlu0 %1827
  %1829 = vrot.lane.b32.xlu0 %v1479, 32
  %v1830 = vpop.permute.xlu0 %1829
  %1831 = vrot.lane.b32.xlu0 %v1468, 32
  %v1832 = vpop.permute.xlu0 %1831
  %1833 = vrot.lane.b32.xlu0 %v1472, 32
  %v1834 = vpop.permute.xlu0 %1833
  %1835 = vrot.lane.b32.xlu0 %v1476, 32
  %v1836 = vpop.permute.xlu0 %1835
  %1837 = vrot.lane.b32.xlu0 %v1480, 32
  %v1838 = vpop.permute.xlu0 %1837
  %1839 = vrot.lane.b32.xlu0 %v1469, 32
  %v1840 = vpop.permute.xlu0 %1839
  %1841 = vrot.lane.b32.xlu0 %v1473, 32
  %v1842 = vpop.permute.xlu0 %1841
  %1843 = vrot.lane.b32.xlu0 %v1477, 32
  %v1844 = vpop.permute.xlu0 %1843
  %1845 = vrot.lane.b32.xlu0 %v1481, 32
  %v1846 = vpop.permute.xlu0 %1845
  %1847 = vrot.lane.b32.xlu0 %v1470, 32
  %v1848 = vpop.permute.xlu0 %1847
  %1849 = vrot.lane.b32.xlu0 %v1474, 32
  %v1850 = vpop.permute.xlu0 %1849
  %1851 = vrot.lane.b32.xlu0 %v1478, 32
  %v1852 = vpop.permute.xlu0 %1851
  %1853 = vrot.lane.b32.xlu0 %v1482, 32
  %v1854 = vpop.permute.xlu0 %1853
  %v1855 = vsel %vm251, %v1840, %v1848
  %v1856 = vsel %vm251, %v1842, %v1850
  %v1857 = vsel %vm251, %v1844, %v1852
  %v1858 = vsel %vm251, %v1846, %v1854
  %v1859 = vsel %vm251, %v1832, %v1840
  %v1860 = vsel %vm251, %v1834, %v1842
  %v1861 = vsel %vm251, %v1836, %v1844
  %v1862 = vsel %vm251, %v1838, %v1846
  %v1863 = vsel %vm251, %v1824, %v1832
  %v1864 = vsel %vm251, %v1826, %v1834
  %v1865 = vsel %vm251, %v1828, %v1836
  %v1866 = vsel %vm251, %v1830, %v1838
  %v1867 = vsel %vm251, %v1848, %v1824
  %v1868 = vsel %vm251, %v1850, %v1826
  %v1869 = vsel %vm251, %v1852, %v1828
  %v1870 = vsel %vm251, %v1854, %v1830
  %s1871 = scalar_lea.vmem %s5, 3
  %v1872 = vld [vmem:[%s1871] ss:$8 sm:$0xf]
  %v1874 = vlaneseq
  %v1875 = vshrl.u32 %v1874, 7
  %v1876 = vsub.s32 0, %v1875
  %v1877 = vrot.slane %v1872, %v1876
  %v1878 = vlaneseq
  %v1879 = vshrl.u32 %v1878, 7
  %v1880 = vsub.s32 1, %v1879
  %v1881 = vrot.slane %v1872, %v1880
  %v1882 = vlaneseq
  %v1883 = vshrl.u32 %v1882, 7
  %v1884 = vsub.s32 2, %v1883
  %v1885 = vrot.slane %v1872, %v1884
  %v1886 = vlaneseq
  %v1887 = vshrl.u32 %v1886, 7
  %v1888 = vsub.s32 3, %v1887
  %v1889 = vrot.slane %v1872, %v1888
  %v1894 = vmul.f32 %v1867, %v1877
  %v1895 = vmul.f32 %v1863, %v1881
  %v1896 = vmul.f32 %v1859, %v1885
  %v1897 = vmul.f32 %v1855, %v1889
  %v1898 = vmul.f32 %v1868, %v1877
  %v1899 = vmul.f32 %v1864, %v1881
  %v1900 = vmul.f32 %v1860, %v1885
  %v1901 = vmul.f32 %v1856, %v1889
  %v1902 = vmul.f32 %v1869, %v1877
  %v1903 = vmul.f32 %v1865, %v1881
  %v1904 = vmul.f32 %v1861, %v1885
  %v1905 = vmul.f32 %v1857, %v1889
  %v1906 = vmul.f32 %v1870, %v1877
  %v1907 = vmul.f32 %v1866, %v1881
  %v1908 = vmul.f32 %v1862, %v1885
  %v1909 = vmul.f32 %v1858, %v1889
  %s1910 = scalar_lea.vmem %s5, 4
  %v1911 = vld [vmem:[%s1910] ss:$8 sm:$0xf]
  %v1913 = vlaneseq
  %v1914 = vshrl.u32 %v1913, 7
  %v1915 = vsub.s32 0, %v1914
  %v1916 = vrot.slane %v1911, %v1915
  %v1917 = vlaneseq
  %v1918 = vshrl.u32 %v1917, 7
  %v1919 = vsub.s32 1, %v1918
  %v1920 = vrot.slane %v1911, %v1919
  %v1921 = vlaneseq
  %v1922 = vshrl.u32 %v1921, 7
  %v1923 = vsub.s32 2, %v1922
  %v1924 = vrot.slane %v1911, %v1923
  %v1925 = vlaneseq
  %v1926 = vshrl.u32 %v1925, 7
  %v1927 = vsub.s32 3, %v1926
  %v1928 = vrot.slane %v1911, %v1927
  %v1933 = vmul.f32 %v1467, %v1916
  %v1934 = vmul.f32 %v1468, %v1920
  %v1935 = vmul.f32 %v1469, %v1924
  %v1936 = vmul.f32 %v1470, %v1928
  %v1937 = vmul.f32 %v1471, %v1916
  %v1938 = vmul.f32 %v1472, %v1920
  %v1939 = vmul.f32 %v1473, %v1924
  %v1940 = vmul.f32 %v1474, %v1928
  %v1941 = vmul.f32 %v1475, %v1916
  %v1942 = vmul.f32 %v1476, %v1920
  %v1943 = vmul.f32 %v1477, %v1924
  %v1944 = vmul.f32 %v1478, %v1928
  %v1945 = vmul.f32 %v1479, %v1916
  %v1946 = vmul.f32 %v1480, %v1920
  %v1947 = vmul.f32 %v1481, %v1924
  %v1948 = vmul.f32 %v1482, %v1928
  %v1949 = vadd.f32 %v1894, %v1933
  %v1950 = vadd.f32 %v1895, %v1934
  %v1951 = vadd.f32 %v1896, %v1935
  %v1952 = vadd.f32 %v1897, %v1936
  %v1953 = vadd.f32 %v1898, %v1937
  %v1954 = vadd.f32 %v1899, %v1938
  %v1955 = vadd.f32 %v1900, %v1939
  %v1956 = vadd.f32 %v1901, %v1940
  %v1957 = vadd.f32 %v1902, %v1941
  %v1958 = vadd.f32 %v1903, %v1942
  %v1959 = vadd.f32 %v1904, %v1943
  %v1960 = vadd.f32 %v1905, %v1944
  %v1961 = vadd.f32 %v1906, %v1945
  %v1962 = vadd.f32 %v1907, %v1946
  %v1963 = vadd.f32 %v1908, %v1947
  %v1964 = vadd.f32 %v1909, %v1948
  %1965 = vrot.lane.b32.xlu0 %v1467, 96
  %v1966 = vpop.permute.xlu0 %1965
  %1967 = vrot.lane.b32.xlu0 %v1471, 96
  %v1968 = vpop.permute.xlu0 %1967
  %1969 = vrot.lane.b32.xlu0 %v1475, 96
  %v1970 = vpop.permute.xlu0 %1969
  %1971 = vrot.lane.b32.xlu0 %v1479, 96
  %v1972 = vpop.permute.xlu0 %1971
  %1973 = vrot.lane.b32.xlu0 %v1468, 96
  %v1974 = vpop.permute.xlu0 %1973
  %1975 = vrot.lane.b32.xlu0 %v1472, 96
  %v1976 = vpop.permute.xlu0 %1975
  %1977 = vrot.lane.b32.xlu0 %v1476, 96
  %v1978 = vpop.permute.xlu0 %1977
  %1979 = vrot.lane.b32.xlu0 %v1480, 96
  %v1980 = vpop.permute.xlu0 %1979
  %1981 = vrot.lane.b32.xlu0 %v1469, 96
  %v1982 = vpop.permute.xlu0 %1981
  %1983 = vrot.lane.b32.xlu0 %v1473, 96
  %v1984 = vpop.permute.xlu0 %1983
  %1985 = vrot.lane.b32.xlu0 %v1477, 96
  %v1986 = vpop.permute.xlu0 %1985
  %1987 = vrot.lane.b32.xlu0 %v1481, 96
  %v1988 = vpop.permute.xlu0 %1987
  %1989 = vrot.lane.b32.xlu0 %v1470, 96
  %v1990 = vpop.permute.xlu0 %1989
  %1991 = vrot.lane.b32.xlu0 %v1474, 96
  %v1992 = vpop.permute.xlu0 %1991
  %1993 = vrot.lane.b32.xlu0 %v1478, 96
  %v1994 = vpop.permute.xlu0 %1993
  %1995 = vrot.lane.b32.xlu0 %v1482, 96
  %v1996 = vpop.permute.xlu0 %1995
  %v1997 = vsel %vm393, %v1982, %v1990
  %v1998 = vsel %vm393, %v1984, %v1992
  %v1999 = vsel %vm393, %v1986, %v1994
  %v2000 = vsel %vm393, %v1988, %v1996
  %v2001 = vsel %vm393, %v1974, %v1982
  %v2002 = vsel %vm393, %v1976, %v1984
  %v2003 = vsel %vm393, %v1978, %v1986
  %v2004 = vsel %vm393, %v1980, %v1988
  %v2005 = vsel %vm393, %v1966, %v1974
  %v2006 = vsel %vm393, %v1968, %v1976
  %v2007 = vsel %vm393, %v1970, %v1978
  %v2008 = vsel %vm393, %v1972, %v1980
  %v2009 = vsel %vm393, %v1990, %v1966
  %v2010 = vsel %vm393, %v1992, %v1968
  %v2011 = vsel %vm393, %v1994, %v1970
  %v2012 = vsel %vm393, %v1996, %v1972
  %s2013 = scalar_lea.vmem %s5, 5
  %v2014 = vld [vmem:[%s2013] ss:$8 sm:$0xf]
  %v2016 = vlaneseq
  %v2017 = vshrl.u32 %v2016, 7
  %v2018 = vsub.s32 0, %v2017
  %v2019 = vrot.slane %v2014, %v2018
  %v2020 = vlaneseq
  %v2021 = vshrl.u32 %v2020, 7
  %v2022 = vsub.s32 1, %v2021
  %v2023 = vrot.slane %v2014, %v2022
  %v2024 = vlaneseq
  %v2025 = vshrl.u32 %v2024, 7
  %v2026 = vsub.s32 2, %v2025
  %v2027 = vrot.slane %v2014, %v2026
  %v2028 = vlaneseq
  %v2029 = vshrl.u32 %v2028, 7
  %v2030 = vsub.s32 3, %v2029
  %v2031 = vrot.slane %v2014, %v2030
  %v2036 = vmul.f32 %v2005, %v2019
  %v2037 = vmul.f32 %v2001, %v2023
  %v2038 = vmul.f32 %v1997, %v2027
  %v2039 = vmul.f32 %v2009, %v2031
  %v2040 = vmul.f32 %v2006, %v2019
  %v2041 = vmul.f32 %v2002, %v2023
  %v2042 = vmul.f32 %v1998, %v2027
  %v2043 = vmul.f32 %v2010, %v2031
  %v2044 = vmul.f32 %v2007, %v2019
  %v2045 = vmul.f32 %v2003, %v2023
  %v2046 = vmul.f32 %v1999, %v2027
  %v2047 = vmul.f32 %v2011, %v2031
  %v2048 = vmul.f32 %v2008, %v2019
  %v2049 = vmul.f32 %v2004, %v2023
  %v2050 = vmul.f32 %v2000, %v2027
  %v2051 = vmul.f32 %v2012, %v2031
  %v2052 = vadd.f32 %v1949, %v2036
  %v2053 = vadd.f32 %v1950, %v2037
  %v2054 = vadd.f32 %v1951, %v2038
  %v2055 = vadd.f32 %v1952, %v2039
  %v2056 = vadd.f32 %v1953, %v2040
  %v2057 = vadd.f32 %v1954, %v2041
  %v2058 = vadd.f32 %v1955, %v2042
  %v2059 = vadd.f32 %v1956, %v2043
  %v2060 = vadd.f32 %v1957, %v2044
  %v2061 = vadd.f32 %v1958, %v2045
  %v2062 = vadd.f32 %v1959, %v2046
  %v2063 = vadd.f32 %v1960, %v2047
  %v2064 = vadd.f32 %v1961, %v2048
  %v2065 = vadd.f32 %v1962, %v2049
  %v2066 = vadd.f32 %v1963, %v2050
  %v2067 = vadd.f32 %v1964, %v2051
  %v2068 = vadd.f32 %v1807, %v2052
  %v2069 = vadd.f32 %v1808, %v2053
  %v2070 = vadd.f32 %v1809, %v2054
  %v2071 = vadd.f32 %v1810, %v2055
  %v2072 = vadd.f32 %v1811, %v2056
  %v2073 = vadd.f32 %v1812, %v2057
  %v2074 = vadd.f32 %v1813, %v2058
  %v2075 = vadd.f32 %v1814, %v2059
  %v2076 = vadd.f32 %v1815, %v2060
  %v2077 = vadd.f32 %v1816, %v2061
  %v2078 = vadd.f32 %v1817, %v2062
  %v2079 = vadd.f32 %v1818, %v2063
  %v2080 = vadd.f32 %v1819, %v2064
  %v2081 = vadd.f32 %v1820, %v2065
  %v2082 = vadd.f32 %v1821, %v2066
  %v2083 = vadd.f32 %v1822, %v2067
  %2084 = vrot.lane.b32.xlu0 %v1563, 32
  %v2085 = vpop.permute.xlu0 %2084
  %2086 = vrot.lane.b32.xlu0 %v1567, 32
  %v2087 = vpop.permute.xlu0 %2086
  %2088 = vrot.lane.b32.xlu0 %v1571, 32
  %v2089 = vpop.permute.xlu0 %2088
  %2090 = vrot.lane.b32.xlu0 %v1575, 32
  %v2091 = vpop.permute.xlu0 %2090
  %2092 = vrot.lane.b32.xlu0 %v1564, 32
  %v2093 = vpop.permute.xlu0 %2092
  %2094 = vrot.lane.b32.xlu0 %v1568, 32
  %v2095 = vpop.permute.xlu0 %2094
  %2096 = vrot.lane.b32.xlu0 %v1572, 32
  %v2097 = vpop.permute.xlu0 %2096
  %2098 = vrot.lane.b32.xlu0 %v1576, 32
  %v2099 = vpop.permute.xlu0 %2098
  %2100 = vrot.lane.b32.xlu0 %v1565, 32
  %v2101 = vpop.permute.xlu0 %2100
  %2102 = vrot.lane.b32.xlu0 %v1569, 32
  %v2103 = vpop.permute.xlu0 %2102
  %2104 = vrot.lane.b32.xlu0 %v1573, 32
  %v2105 = vpop.permute.xlu0 %2104
  %2106 = vrot.lane.b32.xlu0 %v1577, 32
  %v2107 = vpop.permute.xlu0 %2106
  %2108 = vrot.lane.b32.xlu0 %v1566, 32
  %v2109 = vpop.permute.xlu0 %2108
  %2110 = vrot.lane.b32.xlu0 %v1570, 32
  %v2111 = vpop.permute.xlu0 %2110
  %2112 = vrot.lane.b32.xlu0 %v1574, 32
  %v2113 = vpop.permute.xlu0 %2112
  %2114 = vrot.lane.b32.xlu0 %v1578, 32
  %v2115 = vpop.permute.xlu0 %2114
  %v2116 = vsel %vm251, %v2101, %v2109
  %v2117 = vsel %vm251, %v2103, %v2111
  %v2118 = vsel %vm251, %v2105, %v2113
  %v2119 = vsel %vm251, %v2107, %v2115
  %v2120 = vsel %vm251, %v2093, %v2101
  %v2121 = vsel %vm251, %v2095, %v2103
  %v2122 = vsel %vm251, %v2097, %v2105
  %v2123 = vsel %vm251, %v2099, %v2107
  %v2124 = vsel %vm251, %v2085, %v2093
  %v2125 = vsel %vm251, %v2087, %v2095
  %v2126 = vsel %vm251, %v2089, %v2097
  %v2127 = vsel %vm251, %v2091, %v2099
  %v2128 = vsel %vm251, %v2109, %v2085
  %v2129 = vsel %vm251, %v2111, %v2087
  %v2130 = vsel %vm251, %v2113, %v2089
  %v2131 = vsel %vm251, %v2115, %v2091
  %s2132 = scalar_lea.vmem %s5, 6
  %v2133 = vld [vmem:[%s2132] ss:$8 sm:$0xf]
  %v2135 = vlaneseq
  %v2136 = vshrl.u32 %v2135, 7
  %v2137 = vsub.s32 0, %v2136
  %v2138 = vrot.slane %v2133, %v2137
  %v2139 = vlaneseq
  %v2140 = vshrl.u32 %v2139, 7
  %v2141 = vsub.s32 1, %v2140
  %v2142 = vrot.slane %v2133, %v2141
  %v2143 = vlaneseq
  %v2144 = vshrl.u32 %v2143, 7
  %v2145 = vsub.s32 2, %v2144
  %v2146 = vrot.slane %v2133, %v2145
  %v2147 = vlaneseq
  %v2148 = vshrl.u32 %v2147, 7
  %v2149 = vsub.s32 3, %v2148
  %v2150 = vrot.slane %v2133, %v2149
  %v2155 = vmul.f32 %v2128, %v2138
  %v2156 = vmul.f32 %v2124, %v2142
  %v2157 = vmul.f32 %v2120, %v2146
  %v2158 = vmul.f32 %v2116, %v2150
  %v2159 = vmul.f32 %v2129, %v2138
  %v2160 = vmul.f32 %v2125, %v2142
  %v2161 = vmul.f32 %v2121, %v2146
  %v2162 = vmul.f32 %v2117, %v2150
  %v2163 = vmul.f32 %v2130, %v2138
  %v2164 = vmul.f32 %v2126, %v2142
  %v2165 = vmul.f32 %v2122, %v2146
  %v2166 = vmul.f32 %v2118, %v2150
  %v2167 = vmul.f32 %v2131, %v2138
  %v2168 = vmul.f32 %v2127, %v2142
  %v2169 = vmul.f32 %v2123, %v2146
  %v2170 = vmul.f32 %v2119, %v2150
  %s2171 = scalar_lea.vmem %s5, 7
  %v2172 = vld [vmem:[%s2171] ss:$8 sm:$0xf]
  %v2174 = vlaneseq
  %v2175 = vshrl.u32 %v2174, 7
  %v2176 = vsub.s32 0, %v2175
  %v2177 = vrot.slane %v2172, %v2176
  %v2178 = vlaneseq
  %v2179 = vshrl.u32 %v2178, 7
  %v2180 = vsub.s32 1, %v2179
  %v2181 = vrot.slane %v2172, %v2180
  %v2182 = vlaneseq
  %v2183 = vshrl.u32 %v2182, 7
  %v2184 = vsub.s32 2, %v2183
  %v2185 = vrot.slane %v2172, %v2184
  %v2186 = vlaneseq
  %v2187 = vshrl.u32 %v2186, 7
  %v2188 = vsub.s32 3, %v2187
  %v2189 = vrot.slane %v2172, %v2188
  %v2194 = vmul.f32 %v1563, %v2177
  %v2195 = vmul.f32 %v1564, %v2181
  %v2196 = vmul.f32 %v1565, %v2185
  %v2197 = vmul.f32 %v1566, %v2189
  %v2198 = vmul.f32 %v1567, %v2177
  %v2199 = vmul.f32 %v1568, %v2181
  %v2200 = vmul.f32 %v1569, %v2185
  %v2201 = vmul.f32 %v1570, %v2189
  %v2202 = vmul.f32 %v1571, %v2177
  %v2203 = vmul.f32 %v1572, %v2181
  %v2204 = vmul.f32 %v1573, %v2185
  %v2205 = vmul.f32 %v1574, %v2189
  %v2206 = vmul.f32 %v1575, %v2177
  %v2207 = vmul.f32 %v1576, %v2181
  %v2208 = vmul.f32 %v1577, %v2185
  %v2209 = vmul.f32 %v1578, %v2189
  %v2210 = vadd.f32 %v2155, %v2194
  %v2211 = vadd.f32 %v2156, %v2195
  %v2212 = vadd.f32 %v2157, %v2196
  %v2213 = vadd.f32 %v2158, %v2197
  %v2214 = vadd.f32 %v2159, %v2198
  %v2215 = vadd.f32 %v2160, %v2199
  %v2216 = vadd.f32 %v2161, %v2200
  %v2217 = vadd.f32 %v2162, %v2201
  %v2218 = vadd.f32 %v2163, %v2202
  %v2219 = vadd.f32 %v2164, %v2203
  %v2220 = vadd.f32 %v2165, %v2204
  %v2221 = vadd.f32 %v2166, %v2205
  %v2222 = vadd.f32 %v2167, %v2206
  %v2223 = vadd.f32 %v2168, %v2207
  %v2224 = vadd.f32 %v2169, %v2208
  %v2225 = vadd.f32 %v2170, %v2209
  %2226 = vrot.lane.b32.xlu0 %v1563, 96
  %v2227 = vpop.permute.xlu0 %2226
  %2228 = vrot.lane.b32.xlu0 %v1567, 96
  %v2229 = vpop.permute.xlu0 %2228
  %2230 = vrot.lane.b32.xlu0 %v1571, 96
  %v2231 = vpop.permute.xlu0 %2230
  %2232 = vrot.lane.b32.xlu0 %v1575, 96
  %v2233 = vpop.permute.xlu0 %2232
  %2234 = vrot.lane.b32.xlu0 %v1564, 96
  %v2235 = vpop.permute.xlu0 %2234
  %2236 = vrot.lane.b32.xlu0 %v1568, 96
  %v2237 = vpop.permute.xlu0 %2236
  %2238 = vrot.lane.b32.xlu0 %v1572, 96
  %v2239 = vpop.permute.xlu0 %2238
  %2240 = vrot.lane.b32.xlu0 %v1576, 96
  %v2241 = vpop.permute.xlu0 %2240
  %2242 = vrot.lane.b32.xlu0 %v1565, 96
  %v2243 = vpop.permute.xlu0 %2242
  %2244 = vrot.lane.b32.xlu0 %v1569, 96
  %v2245 = vpop.permute.xlu0 %2244
  %2246 = vrot.lane.b32.xlu0 %v1573, 96
  %v2247 = vpop.permute.xlu0 %2246
  %2248 = vrot.lane.b32.xlu0 %v1577, 96
  %v2249 = vpop.permute.xlu0 %2248
  %2250 = vrot.lane.b32.xlu0 %v1566, 96
  %v2251 = vpop.permute.xlu0 %2250
  %2252 = vrot.lane.b32.xlu0 %v1570, 96
  %v2253 = vpop.permute.xlu0 %2252
  %2254 = vrot.lane.b32.xlu0 %v1574, 96
  %v2255 = vpop.permute.xlu0 %2254
  %2256 = vrot.lane.b32.xlu0 %v1578, 96
  %v2257 = vpop.permute.xlu0 %2256
  %v2258 = vsel %vm393, %v2243, %v2251
  %v2259 = vsel %vm393, %v2245, %v2253
  %v2260 = vsel %vm393, %v2247, %v2255
  %v2261 = vsel %vm393, %v2249, %v2257
  %v2262 = vsel %vm393, %v2235, %v2243
  %v2263 = vsel %vm393, %v2237, %v2245
  %v2264 = vsel %vm393, %v2239, %v2247
  %v2265 = vsel %vm393, %v2241, %v2249
  %v2266 = vsel %vm393, %v2227, %v2235
  %v2267 = vsel %vm393, %v2229, %v2237
  %v2268 = vsel %vm393, %v2231, %v2239
  %v2269 = vsel %vm393, %v2233, %v2241
  %v2270 = vsel %vm393, %v2251, %v2227
  %v2271 = vsel %vm393, %v2253, %v2229
  %v2272 = vsel %vm393, %v2255, %v2231
  %v2273 = vsel %vm393, %v2257, %v2233
  %s2274 = scalar_lea.vmem %s5, 32
  %v2275 = vld [vmem:[%s2274] ss:$8 sm:$0xf]
  %v2277 = vlaneseq
  %v2278 = vshrl.u32 %v2277, 7
  %v2279 = vsub.s32 0, %v2278
  %v2280 = vrot.slane %v2275, %v2279
  %v2281 = vlaneseq
  %v2282 = vshrl.u32 %v2281, 7
  %v2283 = vsub.s32 1, %v2282
  %v2284 = vrot.slane %v2275, %v2283
  %v2285 = vlaneseq
  %v2286 = vshrl.u32 %v2285, 7
  %v2287 = vsub.s32 2, %v2286
  %v2288 = vrot.slane %v2275, %v2287
  %v2289 = vlaneseq
  %v2290 = vshrl.u32 %v2289, 7
  %v2291 = vsub.s32 3, %v2290
  %v2292 = vrot.slane %v2275, %v2291
  %v2297 = vmul.f32 %v2266, %v2280
  %v2298 = vmul.f32 %v2262, %v2284
  %v2299 = vmul.f32 %v2258, %v2288
  %v2300 = vmul.f32 %v2270, %v2292
  %v2301 = vmul.f32 %v2267, %v2280
  %v2302 = vmul.f32 %v2263, %v2284
  %v2303 = vmul.f32 %v2259, %v2288
  %v2304 = vmul.f32 %v2271, %v2292
  %v2305 = vmul.f32 %v2268, %v2280
  %v2306 = vmul.f32 %v2264, %v2284
  %v2307 = vmul.f32 %v2260, %v2288
  %v2308 = vmul.f32 %v2272, %v2292
  %v2309 = vmul.f32 %v2269, %v2280
  %v2310 = vmul.f32 %v2265, %v2284
  %v2311 = vmul.f32 %v2261, %v2288
  %v2312 = vmul.f32 %v2273, %v2292
  %v2313 = vadd.f32 %v2210, %v2297
  %v2314 = vadd.f32 %v2211, %v2298
  %v2315 = vadd.f32 %v2212, %v2299
  %v2316 = vadd.f32 %v2213, %v2300
  %v2317 = vadd.f32 %v2214, %v2301
  %v2318 = vadd.f32 %v2215, %v2302
  %v2319 = vadd.f32 %v2216, %v2303
  %v2320 = vadd.f32 %v2217, %v2304
  %v2321 = vadd.f32 %v2218, %v2305
  %v2322 = vadd.f32 %v2219, %v2306
  %v2323 = vadd.f32 %v2220, %v2307
  %v2324 = vadd.f32 %v2221, %v2308
  %v2325 = vadd.f32 %v2222, %v2309
  %v2326 = vadd.f32 %v2223, %v2310
  %v2327 = vadd.f32 %v2224, %v2311
  %v2328 = vadd.f32 %v2225, %v2312
  %v2329 = vadd.f32 %v2068, %v2313
  %v2330 = vadd.f32 %v2069, %v2314
  %v2331 = vadd.f32 %v2070, %v2315
  %v2332 = vadd.f32 %v2071, %v2316
  %v2333 = vadd.f32 %v2072, %v2317
  %v2334 = vadd.f32 %v2073, %v2318
  %v2335 = vadd.f32 %v2074, %v2319
  %v2336 = vadd.f32 %v2075, %v2320
  %v2337 = vadd.f32 %v2076, %v2321
  %v2338 = vadd.f32 %v2077, %v2322
  %v2339 = vadd.f32 %v2078, %v2323
  %v2340 = vadd.f32 %v2079, %v2324
  %v2341 = vadd.f32 %v2080, %v2325
  %v2342 = vadd.f32 %v2081, %v2326
  %v2343 = vadd.f32 %v2082, %v2327
  %v2344 = vadd.f32 %v2083, %v2328
  %v2345 = vld [vmem:[%s6] sm:$0xf]
  %v2347 = vlaneseq
  %v2348 = vshrl.u32 %v2347, 7
  %v2349 = vsub.s32 0, %v2348
  %v2350 = vrot.slane %v2345, %v2349
  %v2351 = vlaneseq
  %v2352 = vshrl.u32 %v2351, 7
  %v2353 = vsub.s32 1, %v2352
  %v2354 = vrot.slane %v2345, %v2353
  %v2355 = vlaneseq
  %v2356 = vshrl.u32 %v2355, 7
  %v2357 = vsub.s32 2, %v2356
  %v2358 = vrot.slane %v2345, %v2357
  %v2359 = vlaneseq
  %v2360 = vshrl.u32 %v2359, 7
  %v2361 = vsub.s32 3, %v2360
  %v2362 = vrot.slane %v2345, %v2361
  %v2367 = vadd.f32 %v2329, %v2350
  %v2368 = vadd.f32 %v2330, %v2354
  %v2369 = vadd.f32 %v2331, %v2358
  %v2370 = vadd.f32 %v2332, %v2362
  %v2371 = vadd.f32 %v2333, %v2350
  %v2372 = vadd.f32 %v2334, %v2354
  %v2373 = vadd.f32 %v2335, %v2358
  %v2374 = vadd.f32 %v2336, %v2362
  %v2375 = vadd.f32 %v2337, %v2350
  %v2376 = vadd.f32 %v2338, %v2354
  %v2377 = vadd.f32 %v2339, %v2358
  %v2378 = vadd.f32 %v2340, %v2362
  %v2379 = vadd.f32 %v2341, %v2350
  %v2380 = vadd.f32 %v2342, %v2354
  %v2381 = vadd.f32 %v2343, %v2358
  %v2382 = vadd.f32 %v2344, %v2362
  %v2383 = vadd.f32 %v2367, %v87
  %v2384 = vadd.f32 %v2368, %v88
  %v2385 = vadd.f32 %v2369, %v89
  %v2386 = vadd.f32 %v2370, %v90
  %v2387 = vadd.f32 %v2371, %v91
  %v2388 = vadd.f32 %v2372, %v92
  %v2389 = vadd.f32 %v2373, %v93
  %v2390 = vadd.f32 %v2374, %v94
  %v2391 = vadd.f32 %v2375, %v95
  %v2392 = vadd.f32 %v2376, %v96
  %v2393 = vadd.f32 %v2377, %v97
  %v2394 = vadd.f32 %v2378, %v98
  %v2395 = vadd.f32 %v2379, %v99
  %v2396 = vadd.f32 %v2380, %v100
  %v2397 = vadd.f32 %v2381, %v101
  %v2398 = vadd.f32 %v2382, %v102
  %2399 = vst [vmem:[%s7] sm:$0xff] %v2383
  %2400 = vst [vmem:[%s7 + $0x8] sm:$0xff] %v2384
  %2401 = vst [vmem:[%s7 + $0x10] sm:$0xff] %v2385
  %2402 = vst [vmem:[%s7 + $0x18] sm:$0xff] %v2386
  %2403 = vst [vmem:[%s7 + $0x20] sm:$0xff] %v2387
  %2404 = vst [vmem:[%s7 + $0x28] sm:$0xff] %v2388
  %2405 = vst [vmem:[%s7 + $0x30] sm:$0xff] %v2389
  %2406 = vst [vmem:[%s7 + $0x38] sm:$0xff] %v2390
  %2407 = vst [vmem:[%s7 + $0x40] sm:$0xff] %v2391
  %2408 = vst [vmem:[%s7 + $0x48] sm:$0xff] %v2392
  %2409 = vst [vmem:[%s7 + $0x50] sm:$0xff] %v2393
  %2410 = vst [vmem:[%s7 + $0x58] sm:$0xff] %v2394
  %2411 = vst [vmem:[%s7 + $0x60] sm:$0xff] %v2395
  %2412 = vst [vmem:[%s7 + $0x68] sm:$0xff] %v2396
  %2413 = vst [vmem:[%s7 + $0x70] sm:$0xff] %v2397
  %2414 = vst [vmem:[%s7 + $0x78] sm:$0xff] %v2398
  // Predicated region
  $region30: #{sandglass_forward.1} parent=0 // pred_check
    _
  $region31: #{sandglass_forward.1} parent=0 // pred_check_branch
    %2416 = sbr.rel (0) target = $region33
  $region32: #{sandglass_forward.1} parent=0 // pred_region
    _
  $region33: #{sandglass_forward.1} parent=0 // pred_fallthru
    _
  // Predicated region
  $region34: #{sandglass_forward.1} parent=0 // pred_check
    _
  $region35: #{sandglass_forward.1} parent=0 // pred_check_branch
    %2418 = sbr.rel (0) target = $region37
  $region36: #{sandglass_forward.1} parent=0 // pred_region
    _
  $region37: #{sandglass_forward.1} parent=0 // pred_fallthru
    _

</llo_original>
